<compile_context>
chip_gen: v6e
topology: v6e:2x2x1
jax: 0.10.0
libtpu: 0.0.40
codegen_flags: <defaults>
</compile_context>

<pallas_src>
import jax
import jax.numpy as jnp
from jax import lax
from jax.experimental import pallas as pl
from jax.experimental.pallas import tpu as pltpu

_DN_LAST = (((1,), (1,)), ((), ()))  # contract last dims: A @ B^T
_VMEM_LIMIT = 48 * 1024 * 1024       # fits v7x 64 MiB, raises v5e 16 MiB default


def _pass1_kernel(x_ref, ws_ref, shs_ref, wp_ref, shp_ref,
                  w1a_ref, b1a_ref, w1c_ref,
                  w2a_ref, b2a_ref, w2c_ref, wfc2_ref,
                  wg_ref, acc_ref):
    l = pl.program_id(1)

    @pl.when(l == 0)
    def _():
        acc_ref[...] = jnp.zeros_like(acc_ref)

    xb = x_ref[0].astype(jnp.bfloat16)                    # (C, tl), cast in-kernel
    # conv_state / conv_proj (BN scale & 1/L pre-folded), shift fused into ReLU.
    # Two separate dots: same MXU FLOPs as a fused one, no sublane slice.
    state = jnp.maximum(
        jnp.dot(ws_ref[...], xb, preferred_element_type=jnp.float32)
        + shs_ref[...], 0.0).astype(jnp.bfloat16)         # (num_s, tl)
    proj = jnp.maximum(
        jnp.dot(wp_ref[...], xb, preferred_element_type=jnp.float32)
        + shp_ref[...], 0.0).astype(jnp.bfloat16)         # (num_n, tl)

    # Partial graph projection: a += state @ proj^T over L tiles.
    # TODO(synk): if the bundle shows XLU saturation from this lane-axis
    #             contraction, restructure to produce proj transposed.
    acc_ref[...] += lax.dot_general(state, proj, _DN_LAST,
                                    preferred_element_type=jnp.float32)

    @pl.when(l == pl.num_programs(1) - 1)
    def _():
        a = acc_ref[...]                                  # (num_s, num_n) f32
        # GCN 1: node-dim conv (bias) + residual + LeakyReLU(0.2) + state-dim conv
        h = lax.dot_general(a.astype(jnp.bfloat16), w1a_ref[...], _DN_LAST,
                            preferred_element_type=jnp.float32) + b1a_ref[...] + a
        h = jnp.maximum(h, 0.2 * h)
        g1 = jnp.dot(w1c_ref[...], h.astype(jnp.bfloat16),
                     preferred_element_type=jnp.float32)
        # GCN 2
        h2 = lax.dot_general(g1.astype(jnp.bfloat16), w2a_ref[...], _DN_LAST,
                             preferred_element_type=jnp.float32) + b2a_ref[...] + g1
        h2 = jnp.maximum(h2, 0.2 * h2)
        g2 = jnp.dot(w2c_ref[...], h2.astype(jnp.bfloat16),
                     preferred_element_type=jnp.float32)
        # Fold fc_2 (blocker-BN scale already in wfc2): wg = W_fc2 @ g2 -> (C, num_n)
        wg_ref[0] = jnp.dot(wfc2_ref[...], g2.astype(jnp.bfloat16),
                            preferred_element_type=jnp.float32).astype(wg_ref.dtype)


def _pass2_kernel(x_ref, wg_ref, wr_ref, shr_ref, shb_ref, out_ref):
    xb = x_ref[0]                                         # (C, tl) f32
    xb16 = xb.astype(jnp.bfloat16)
    # conv_reproj (BN scale folded) + ReLU
    rproj = jnp.maximum(
        jnp.dot(wr_ref[...], xb16, preferred_element_type=jnp.float32)
        + shr_ref[...], 0.0)                              # (num_n, tl)
    # fused reverse projection + fc_2: z = wg @ rproj + blocker shift
    z = jnp.dot(wg_ref[0], rproj.astype(jnp.bfloat16),
                preferred_element_type=jnp.float32) + shb_ref[...]
    out_ref[0] = xb + z                                   # residual in f32


def _pick_lane_tile(L, C):
    # VMEM-budget / MXU-width aware: prefer 512 when C is large (v5e scoped
    # VMEM and v7x 64 MiB), prefer >= 256 for the 256-wide MXUs (v6e/v7x).
    candidates = (512, 1024, 256, 128) if C >= 512 else (1024, 512, 256, 128)
    for t in candidates:
        if L % t == 0:
            return t
    return L  # TODO(synk): pad L to a multiple of 256 instead.


@jax.jit
def glore_unit(x_nchw, p):
    B, C, H, W = x_nchw.shape
    L = H * W
    num_s = p["w1c"].shape[0]
    num_n = p["w1a"].shape[0]
    tl = _pick_lane_tile(L, C)
    n_l = L // tl

    x_f32 = x_nchw.reshape(B, C, L).astype(jnp.float32)

    # Host-side constant folding: BN scales (and 1/L) into the conv weights.
    w_state = (p["w_state"] * p["sc_s"]).astype(jnp.bfloat16)          # (num_s, C)
    sh_s = p["sh_s"].astype(jnp.float32)
    w_proj = (p["w_proj"] * (p["sc_p"] * (1.0 / L))).astype(jnp.bfloat16)  # (num_n, C)
    sh_p = (p["sh_p"] * (1.0 / L)).astype(jnp.float32)
    w_r = (p["w_rproj"] * p["sc_r"]).astype(jnp.bfloat16)              # (num_n, C)
    sh_r = p["sh_r"].astype(jnp.float32)
    w_fc2 = (p["w_fc2"] * p["sc_b"]).astype(jnp.bfloat16)              # (C, num_s)
    sh_b = p["sh_b"].astype(jnp.float32)
    gcn_w = [p["w1a"].astype(jnp.bfloat16), p["b1a"].astype(jnp.float32),
             p["w1c"].astype(jnp.bfloat16), p["w2a"].astype(jnp.bfloat16),
             p["b2a"].astype(jnp.float32), p["w2c"].astype(jnp.bfloat16)]

    def full_spec(arr):
        nd = arr.ndim
        return pl.BlockSpec(arr.shape, lambda b, l, _nd=nd: (0,) * _nd)

    # ---- pass 1: accumulate a over L tiles, GCN1/GCN2, fold fc_2 -> wg ----
    pass1_consts = [w_state, sh_s, w_proj, sh_p] + gcn_w + [w_fc2]
    wg = pl.pallas_call(
        _pass1_kernel,
        out_shape=jax.ShapeDtypeStruct((B, C, num_n), jnp.bfloat16),
        grid_spec=pltpu.PrefetchScalarGridSpec(
            num_scalar_prefetch=0,
            grid=(B, n_l),
            in_specs=[pl.BlockSpec((1, C, tl), lambda b, l: (b, 0, l))]
                     + [full_spec(w) for w in pass1_consts],
            out_specs=pl.BlockSpec((1, C, num_n), lambda b, l: (b, 0, 0)),
            scratch_shapes=[pltpu.VMEM((num_s, num_n), jnp.float32)],
        ),
        compiler_params=pltpu.CompilerParams(
            dimension_semantics=("parallel", "arbitrary"),
            vmem_limit_bytes=_VMEM_LIMIT),
    )(x_f32, *pass1_consts)

    # ---- pass 2: rproj, fused (fc_2 . g2) @ rproj + BN shift, residual ----
    pass2_consts = [w_r, sh_r, sh_b]
    out = pl.pallas_call(
        _pass2_kernel,
        out_shape=jax.ShapeDtypeStruct((B, C, L), jnp.float32),
        grid_spec=pltpu.PrefetchScalarGridSpec(
            num_scalar_prefetch=0,
            grid=(B, n_l),
            in_specs=[pl.BlockSpec((1, C, tl), lambda b, l: (b, 0, l)),
                      pl.BlockSpec((1, C, num_n), lambda b, l: (b, 0, 0))]
                     + [full_spec(w) for w in pass2_consts],
            out_specs=pl.BlockSpec((1, C, tl), lambda b, l: (b, 0, l)),
        ),
        compiler_params=pltpu.CompilerParams(
            dimension_semantics=("parallel", "parallel"),
            vmem_limit_bytes=_VMEM_LIMIT),
        input_output_aliases={0: 0},   # write output in place of the f32 x slab
    )(x_f32, wg, *pass2_consts)

    return out.reshape(B, C, H, W)


def make_params(key, num_in, num_mid):
    num_s, num_n = 2 * num_mid, 1 * num_mid
    ks = jax.random.split(key, 26)
    ki = iter(range(26))

    def w(shape, scale=0.3):
        return jax.random.normal(ks[next(ki)], shape, jnp.float32) * scale

    def bn_fold(c):
        gamma = 1.0 + 0.1 * jax.random.normal(ks[next(ki)], (c, 1), jnp.float32)
        beta = 0.1 * jax.random.normal(ks[next(ki)], (c, 1), jnp.float32)
        mean = 0.1 * jax.random.normal(ks[next(ki)], (c, 1), jnp.float32)
        var = jnp.abs(jax.random.normal(ks[next(ki)], (c, 1), jnp.float32)) + 0.5
        scale = gamma / jnp.sqrt(var + 1e-5)
        shift = beta - mean * scale
        return scale, shift

    p = {}
    p["w_state"] = w((num_s, num_in))              # conv_state 1x1 weight
    p["sc_s"], p["sh_s"] = bn_fold(num_s)
    p["w_proj"] = w((num_n, num_in))
    p["sc_p"], p["sh_p"] = bn_fold(num_n)
    p["w_rproj"] = w((num_n, num_in))
    p["sc_r"], p["sh_r"] = bn_fold(num_n)
    p["w1a"] = w((num_n, num_n))                   # gcn1.conv1 (node dim, bias=True)
    p["b1a"] = w((1, num_n), 0.1)
    p["w1c"] = w((num_s, num_s))                   # gcn1.conv2 (state dim, bias=False)
    p["w2a"] = w((num_n, num_n))
    p["b2a"] = w((1, num_n), 0.1)
    p["w2c"] = w((num_s, num_s))
    p["w_fc2"] = w((num_in, num_s))                # fc_2 1x1, no bias
    p["sc_b"], p["sh_b"] = bn_fold(num_in)         # blocker BN
    return p


def glore_ref(x_nchw, p):
    """Pure-JAX f32 reference of the same (eval-mode BN) forward."""
    B, C, H, W = x_nchw.shape
    L = H * W
    x = x_nchw.reshape(B, C, L)
    state = jax.nn.relu(jnp.einsum('sc,bcl->bsl', p["w_state"], x) * p["sc_s"] + p["sh_s"])
    proj = jax.nn.relu(jnp.einsum('nc,bcl->bnl', p["w_proj"], x) * p["sc_p"] + p["sh_p"])
    rproj = jax.nn.relu(jnp.einsum('nc,bcl->bnl', p["w_rproj"], x) * p["sc_r"] + p["sh_r"])
    a = jnp.einsum('bsl,bnl->bsn', state, proj) / L

    def gcn(a, w1, b1, w2):
        h = jnp.einsum('bsn,mn->bsm', a, w1) + b1
        h = h + a
        h = jnp.where(h > 0, h, 0.2 * h)
        return jnp.einsum('ts,bsn->btn', w2, h)

    g1 = gcn(a, p["w1a"], p["b1a"], p["w1c"])
    g2 = gcn(g1, p["w2a"], p["b2a"], p["w2c"])
    y = jnp.einsum('bsn,bnl->bsl', g2, rproj)
    z = jnp.einsum('cs,bsl->bcl', p["w_fc2"], y) * p["sc_b"] + p["sh_b"]
    return (x + z).reshape(B, C, H, W)


if __name__ == "__main__":
    key = jax.random.PRNGKey(0)
    kx, kp = jax.random.split(key)
    B, num_in, num_mid, H, W = 2, 4, 4, 16, 16
    x = jax.random.normal(kx, (B, num_in, H, W), jnp.float32)
    params = make_params(kp, num_in, num_mid)

    out = glore_unit(x, params)
    out = jax.block_until_ready(out)

    ref = glore_ref(x, params)
    assert out.shape == (B, num_in, H, W)
    max_err = float(jnp.max(jnp.abs(out - ref)))
    scale = max(1.0, float(jnp.max(jnp.abs(ref))))
    # bf16 matmul operands (f32 accumulation) -> relaxed tolerance vs f32 reference
    assert max_err <= 2e-2 * scale, f"mismatch vs reference: {max_err} (scale {scale})"
    print("KERNEL_OK")
</pallas_src>

<mosaic_0001>
module attributes {stable_mosaic.version = 11 : i64} {
  func.func @_pass1_kernel(%arg0: i32, %arg1: i32, %arg2: memref<1x4x256xf32, #tpu.memory_space<vmem>>, %arg3: memref<8x4xbf16, #tpu.memory_space<vmem>>, %arg4: memref<8x1xf32, #tpu.memory_space<vmem>>, %arg5: memref<4x4xbf16, #tpu.memory_space<vmem>>, %arg6: memref<4x1xf32, #tpu.memory_space<vmem>>, %arg7: memref<4x4xbf16, #tpu.memory_space<vmem>>, %arg8: memref<1x4xf32, #tpu.memory_space<vmem>>, %arg9: memref<8x8xbf16, #tpu.memory_space<vmem>>, %arg10: memref<4x4xbf16, #tpu.memory_space<vmem>>, %arg11: memref<1x4xf32, #tpu.memory_space<vmem>>, %arg12: memref<8x8xbf16, #tpu.memory_space<vmem>>, %arg13: memref<4x8xbf16, #tpu.memory_space<vmem>>, %arg14: memref<1x4x4xbf16, #tpu.memory_space<vmem>>, %arg15: memref<8x4xf32, #tpu.memory_space<vmem>>) attributes {dimension_semantics = [#tpu.dimension_semantics<parallel>, #tpu.dimension_semantics<arbitrary>], iteration_bounds = array<i64: 2, 1>, scalar_prefetch = 0 : i64, scratch_operands = 1 : i64, tpu.core_type = #tpu.core_type<tc>, window_params = [{transform_indices = @transform_0, window_bounds = array<i64: 1, 4, 256>}, {pipeline_mode = #tpu.pipeline_mode<synchronous>, transform_indices = @transform_1, window_bounds = array<i64: 8, 4>}, {pipeline_mode = #tpu.pipeline_mode<synchronous>, transform_indices = @transform_2, window_bounds = array<i64: 8, 1>}, {pipeline_mode = #tpu.pipeline_mode<synchronous>, transform_indices = @transform_3, window_bounds = array<i64: 4, 4>}, {pipeline_mode = #tpu.pipeline_mode<synchronous>, transform_indices = @transform_4, window_bounds = array<i64: 4, 1>}, {pipeline_mode = #tpu.pipeline_mode<synchronous>, transform_indices = @transform_5, window_bounds = array<i64: 4, 4>}, {pipeline_mode = #tpu.pipeline_mode<synchronous>, transform_indices = @transform_6, window_bounds = array<i64: 1, 4>}, {pipeline_mode = #tpu.pipeline_mode<synchronous>, transform_indices = @transform_7, window_bounds = array<i64: 8, 8>}, {pipeline_mode = #tpu.pipeline_mode<synchronous>, transform_indices = @transform_8, window_bounds = array<i64: 4, 4>}, {pipeline_mode = #tpu.pipeline_mode<synchronous>, transform_indices = @transform_9, window_bounds = array<i64: 1, 4>}, {pipeline_mode = #tpu.pipeline_mode<synchronous>, transform_indices = @transform_10, window_bounds = array<i64: 8, 8>}, {pipeline_mode = #tpu.pipeline_mode<synchronous>, transform_indices = @transform_11, window_bounds = array<i64: 4, 8>}, {transform_indices = @transform_12, window_bounds = array<i64: 1, 4, 4>}]} {
    %c0_i32 = arith.constant 0 : i32
    %0 = arith.cmpi eq, %arg1, %c0_i32 : i32
    %1 = arith.extui %0 : i1 to i32
    %c0_i32_0 = arith.constant 0 : i32
    %2 = arith.cmpi ne, %1, %c0_i32_0 : i32
    scf.if %2 {
      %cst_21 = arith.constant 0.000000e+00 : f32
      %29 = vector.broadcast %cst_21 : f32 to vector<8x4xf32>
      %c0_22 = arith.constant 0 : index
      %c0_23 = arith.constant 0 : index
      %30 = vector.load %arg15[%c0_22, %c0_23] : memref<8x4xf32, #tpu.memory_space<vmem>>, vector<8x4xf32>
      tpu.vector_store %arg15[%c0_22, %c0_23], %29 {strides = array<i32>} : memref<8x4xf32, #tpu.memory_space<vmem>>, vector<8x4xf32>,
    } else {
    }
    %c0 = arith.constant 0 : index
    %c0_1 = arith.constant 0 : index
    %c0_2 = arith.constant 0 : index
    %3 = vector.load %arg2[%c0, %c0_1, %c0_2] : memref<1x4x256xf32, #tpu.memory_space<vmem>>, vector<1x4x256xf32>
    %4 = vector.shape_cast %3 : vector<1x4x256xf32> to vector<4x256xf32>
    %5 = arith.truncf %4 : vector<4x256xf32> to vector<4x256xbf16>
    %c0_3 = arith.constant 0 : index
    %c0_4 = arith.constant 0 : index
    %6 = vector.load %arg3[%c0_3, %c0_4] : memref<8x4xbf16, #tpu.memory_space<vmem>>, vector<8x4xbf16>
    %cst = arith.constant dense<0.000000e+00> : vector<8x256xf32>
    %7 = tpu.matmul %6, %5, %cst {dimension_numbers = #tpu.dot_dimension_numbers<[1], [0], [0], [1], [0, 0, 1, 1], [], []>} : vector<8x4xbf16>, vector<4x256xbf16>, vector<8x256xf32> -> vector<8x256xf32>
    %c0_5 = arith.constant 0 : index
    %c0_6 = arith.constant 0 : index
    %8 = vector.load %arg4[%c0_5, %c0_6] : memref<8x1xf32, #tpu.memory_space<vmem>>, vector<8x1xf32>
    %9 = vector.broadcast %8 : vector<8x1xf32> to vector<8x256xf32>
    %10 = arith.addf %7, %9 : vector<8x256xf32>
    %cst_7 = arith.constant 0.000000e+00 : f32
    %11 = vector.broadcast %cst_7 : f32 to vector<8x256xf32>
    %12 = arith.maximumf %10, %11 : vector<8x256xf32>
    %13 = arith.truncf %12 : vector<8x256xf32> to vector<8x256xbf16>
    %c0_8 = arith.constant 0 : index
    %c0_9 = arith.constant 0 : index
    %14 = vector.load %arg5[%c0_8, %c0_9] : memref<4x4xbf16, #tpu.memory_space<vmem>>, vector<4x4xbf16>
    %cst_10 = arith.constant dense<0.000000e+00> : vector<4x256xf32>
    %15 = tpu.matmul %14, %5, %cst_10 {dimension_numbers = #tpu.dot_dimension_numbers<[1], [0], [0], [1], [0, 0, 1, 1], [], []>} : vector<4x4xbf16>, vector<4x256xbf16>, vector<4x256xf32> -> vector<4x256xf32>
    %c0_11 = arith.constant 0 : index
    %c0_12 = arith.constant 0 : index
    %16 = vector.load %arg6[%c0_11, %c0_12] : memref<4x1xf32, #tpu.memory_space<vmem>>, vector<4x1xf32>
    %17 = vector.broadcast %16 : vector<4x1xf32> to vector<4x256xf32>
    %18 = arith.addf %15, %17 : vector<4x256xf32>
    %cst_13 = arith.constant 0.000000e+00 : f32
    %19 = vector.broadcast %cst_13 : f32 to vector<4x256xf32>
    %20 = arith.maximumf %18, %19 : vector<4x256xf32>
    %21 = arith.truncf %20 : vector<4x256xf32> to vector<4x256xbf16>
    %c0_14 = arith.constant 0 : index
    %c0_15 = arith.constant 0 : index
    %22 = vector.load %arg15[%c0_14, %c0_15] : memref<8x4xf32, #tpu.memory_space<vmem>>, vector<8x4xf32>
    %cst_16 = arith.constant dense<0.000000e+00> : vector<8x4xf32>
    %23 = tpu.matmul %13, %21, %cst_16 {dimension_numbers = #tpu.dot_dimension_numbers<[1], [1], [0], [0], [0, 0, 1, 0], [], []>} : vector<8x256xbf16>, vector<4x256xbf16>, vector<8x4xf32> -> vector<8x4xf32>
    %24 = arith.addf %22, %23 : vector<8x4xf32>
    %c0_17 = arith.constant 0 : index
    %c0_18 = arith.constant 0 : index
    %25 = vector.load %arg15[%c0_17, %c0_18] : memref<8x4xf32, #tpu.memory_space<vmem>>, vector<8x4xf32>
    tpu.vector_store %arg15[%c0_17, %c0_18], %24 {strides = array<i32>} : memref<8x4xf32, #tpu.memory_space<vmem>>, vector<8x4xf32>,
    %c0_i32_19 = arith.constant 0 : i32
    %26 = arith.cmpi eq, %arg1, %c0_i32_19 : i32
    %27 = arith.extui %26 : i1 to i32
    %c0_i32_20 = arith.constant 0 : i32
    %28 = arith.cmpi ne, %27, %c0_i32_20 : i32
    scf.if %28 {
      %c0_21 = arith.constant 0 : index
      %c0_22 = arith.constant 0 : index
      %29 = vector.load %arg15[%c0_21, %c0_22] : memref<8x4xf32, #tpu.memory_space<vmem>>, vector<8x4xf32>
      %30 = arith.truncf %29 : vector<8x4xf32> to vector<8x4xbf16>
      %c0_23 = arith.constant 0 : index
      %c0_24 = arith.constant 0 : index
      %31 = vector.load %arg7[%c0_23, %c0_24] : memref<4x4xbf16, #tpu.memory_space<vmem>>, vector<4x4xbf16>
      %cst_25 = arith.constant dense<0.000000e+00> : vector<8x4xf32>
      %32 = tpu.matmul %30, %31, %cst_25 {dimension_numbers = #tpu.dot_dimension_numbers<[1], [1], [0], [0], [0, 0, 1, 0], [], []>} : vector<8x4xbf16>, vector<4x4xbf16>, vector<8x4xf32> -> vector<8x4xf32>
      %c0_26 = arith.constant 0 : index
      %c0_27 = arith.constant 0 : index
      %33 = vector.load %arg8[%c0_26, %c0_27] : memref<1x4xf32, #tpu.memory_space<vmem>>, vector<1x4xf32>
      %34 = vector.broadcast %33 : vector<1x4xf32> to vector<8x4xf32>
      %35 = arith.addf %32, %34 : vector<8x4xf32>
      %36 = arith.addf %35, %29 : vector<8x4xf32>
      %cst_28 = arith.constant 2.000000e-01 : f32
      %37 = vector.broadcast %cst_28 : f32 to vector<8x4xf32>
      %38 = arith.mulf %37, %36 : vector<8x4xf32>
      %39 = arith.maximumf %36, %38 : vector<8x4xf32>
      %c0_29 = arith.constant 0 : index
      %c0_30 = arith.constant 0 : index
      %40 = vector.load %arg9[%c0_29, %c0_30] : memref<8x8xbf16, #tpu.memory_space<vmem>>, vector<8x8xbf16>
      %41 = arith.truncf %39 : vector<8x4xf32> to vector<8x4xbf16>
      %cst_31 = arith.constant dense<0.000000e+00> : vector<8x4xf32>
      %42 = tpu.matmul %40, %41, %cst_31 {dimension_numbers = #tpu.dot_dimension_numbers<[1], [0], [0], [1], [0, 0, 1, 1], [], []>} : vector<8x8xbf16>, vector<8x4xbf16>, vector<8x4xf32> -> vector<8x4xf32>
      %43 = arith.truncf %42 : vector<8x4xf32> to vector<8x4xbf16>
      %c0_32 = arith.constant 0 : index
      %c0_33 = arith.constant 0 : index
      %44 = vector.load %arg10[%c0_32, %c0_33] : memref<4x4xbf16, #tpu.memory_space<vmem>>, vector<4x4xbf16>
      %cst_34 = arith.constant dense<0.000000e+00> : vector<8x4xf32>
      %45 = tpu.matmul %43, %44, %cst_34 {dimension_numbers = #tpu.dot_dimension_numbers<[1], [1], [0], [0], [0, 0, 1, 0], [], []>} : vector<8x4xbf16>, vector<4x4xbf16>, vector<8x4xf32> -> vector<8x4xf32>
      %c0_35 = arith.constant 0 : index
      %c0_36 = arith.constant 0 : index
      %46 = vector.load %arg11[%c0_35, %c0_36] : memref<1x4xf32, #tpu.memory_space<vmem>>, vector<1x4xf32>
      %47 = vector.broadcast %46 : vector<1x4xf32> to vector<8x4xf32>
      %48 = arith.addf %45, %47 : vector<8x4xf32>
      %49 = arith.addf %48, %42 : vector<8x4xf32>
      %cst_37 = arith.constant 2.000000e-01 : f32
      %50 = vector.broadcast %cst_37 : f32 to vector<8x4xf32>
      %51 = arith.mulf %50, %49 : vector<8x4xf32>
      %52 = arith.maximumf %49, %51 : vector<8x4xf32>
      %c0_38 = arith.constant 0 : index
      %c0_39 = arith.constant 0 : index
      %53 = vector.load %arg12[%c0_38, %c0_39] : memref<8x8xbf16, #tpu.memory_space<vmem>>, vector<8x8xbf16>
      %54 = arith.truncf %52 : vector<8x4xf32> to vector<8x4xbf16>
      %cst_40 = arith.constant dense<0.000000e+00> : vector<8x4xf32>
      %55 = tpu.matmul %53, %54, %cst_40 {dimension_numbers = #tpu.dot_dimension_numbers<[1], [0], [0], [1], [0, 0, 1, 1], [], []>} : vector<8x8xbf16>, vector<8x4xbf16>, vector<8x4xf32> -> vector<8x4xf32>
      %c0_41 = arith.constant 0 : index
      %c0_42 = arith.constant 0 : index
      %56 = vector.load %arg13[%c0_41, %c0_42] : memref<4x8xbf16, #tpu.memory_space<vmem>>, vector<4x8xbf16>
      %57 = arith.truncf %55 : vector<8x4xf32> to vector<8x4xbf16>
      %cst_43 = arith.constant dense<0.000000e+00> : vector<4x4xf32>
      %58 = tpu.matmul %56, %57, %cst_43 {dimension_numbers = #tpu.dot_dimension_numbers<[1], [0], [0], [1], [0, 0, 1, 1], [], []>} : vector<4x8xbf16>, vector<8x4xbf16>, vector<4x4xf32> -> vector<4x4xf32>
      %59 = arith.truncf %58 : vector<4x4xf32> to vector<4x4xbf16>
      %c0_44 = arith.constant 0 : index
      %c0_45 = arith.constant 0 : index
      %c0_46 = arith.constant 0 : index
      %60 = vector.load %arg14[%c0_44, %c0_45, %c0_46] : memref<1x4x4xbf16, #tpu.memory_space<vmem>>, vector<1x4x4xbf16>
      %61 = vector.shape_cast %60 : vector<1x4x4xbf16> to vector<4x4xbf16>
      %62 = vector.shape_cast %59 : vector<4x4xbf16> to vector<1x4x4xbf16>
      tpu.vector_store %arg14[%c0_44, %c0_45, %c0_46], %62 {strides = array<i32>} : memref<1x4x4xbf16, #tpu.memory_space<vmem>>, vector<1x4x4xbf16>,
    } else {
    }
    return
  }
  func.func @transform_0(%arg0: i32, %arg1: i32) -> (i32, i32, i32) {
    %c0_i32 = arith.constant 0 : i32
    %c0_i32_0 = arith.constant 0 : i32
    return %arg0, %c0_i32, %arg1 : i32, i32, i32
  }
  func.func @transform_1(%arg0: i32, %arg1: i32) -> (i32, i32) {
    %c0_i32 = arith.constant 0 : i32
    %c0_i32_0 = arith.constant 0 : i32
    %c0_i32_1 = arith.constant 0 : i32
    return %c0_i32, %c0_i32_0 : i32, i32
  }
  func.func @transform_2(%arg0: i32, %arg1: i32) -> (i32, i32) {
    %c0_i32 = arith.constant 0 : i32
    %c0_i32_0 = arith.constant 0 : i32
    %c0_i32_1 = arith.constant 0 : i32
    return %c0_i32, %c0_i32_0 : i32, i32
  }
  func.func @transform_3(%arg0: i32, %arg1: i32) -> (i32, i32) {
    %c0_i32 = arith.constant 0 : i32
    %c0_i32_0 = arith.constant 0 : i32
    %c0_i32_1 = arith.constant 0 : i32
    return %c0_i32, %c0_i32_0 : i32, i32
  }
  func.func @transform_4(%arg0: i32, %arg1: i32) -> (i32, i32) {
    %c0_i32 = arith.constant 0 : i32
    %c0_i32_0 = arith.constant 0 : i32
    %c0_i32_1 = arith.constant 0 : i32
    return %c0_i32, %c0_i32_0 : i32, i32
  }
  func.func @transform_5(%arg0: i32, %arg1: i32) -> (i32, i32) {
    %c0_i32 = arith.constant 0 : i32
    %c0_i32_0 = arith.constant 0 : i32
    %c0_i32_1 = arith.constant 0 : i32
    return %c0_i32, %c0_i32_0 : i32, i32
  }
  func.func @transform_6(%arg0: i32, %arg1: i32) -> (i32, i32) {
    %c0_i32 = arith.constant 0 : i32
    %c0_i32_0 = arith.constant 0 : i32
    %c0_i32_1 = arith.constant 0 : i32
    return %c0_i32, %c0_i32_0 : i32, i32
  }
  func.func @transform_7(%arg0: i32, %arg1: i32) -> (i32, i32) {
    %c0_i32 = arith.constant 0 : i32
    %c0_i32_0 = arith.constant 0 : i32
    %c0_i32_1 = arith.constant 0 : i32
    return %c0_i32, %c0_i32_0 : i32, i32
  }
  func.func @transform_8(%arg0: i32, %arg1: i32) -> (i32, i32) {
    %c0_i32 = arith.constant 0 : i32
    %c0_i32_0 = arith.constant 0 : i32
    %c0_i32_1 = arith.constant 0 : i32
    return %c0_i32, %c0_i32_0 : i32, i32
  }
  func.func @transform_9(%arg0: i32, %arg1: i32) -> (i32, i32) {
    %c0_i32 = arith.constant 0 : i32
    %c0_i32_0 = arith.constant 0 : i32
    %c0_i32_1 = arith.constant 0 : i32
    return %c0_i32, %c0_i32_0 : i32, i32
  }
  func.func @transform_10(%arg0: i32, %arg1: i32) -> (i32, i32) {
    %c0_i32 = arith.constant 0 : i32
    %c0_i32_0 = arith.constant 0 : i32
    %c0_i32_1 = arith.constant 0 : i32
    return %c0_i32, %c0_i32_0 : i32, i32
  }
  func.func @transform_11(%arg0: i32, %arg1: i32) -> (i32, i32) {
    %c0_i32 = arith.constant 0 : i32
    %c0_i32_0 = arith.constant 0 : i32
    %c0_i32_1 = arith.constant 0 : i32
    return %c0_i32, %c0_i32_0 : i32, i32
  }
  func.func @transform_12(%arg0: i32, %arg1: i32) -> (i32, i32, i32) {
    %c0_i32 = arith.constant 0 : i32
    %c0_i32_0 = arith.constant 0 : i32
    %c0_i32_1 = arith.constant 0 : i32
    return %arg0, %c0_i32, %c0_i32_0 : i32, i32, i32
  }
}

module attributes {stable_mosaic.version = 11 : i64} {
  func.func @_pass2_kernel(%arg0: i32, %arg1: i32, %arg2: memref<1x4x256xf32, #tpu.memory_space<vmem>>, %arg3: memref<1x4x4xbf16, #tpu.memory_space<vmem>>, %arg4: memref<4x4xbf16, #tpu.memory_space<vmem>>, %arg5: memref<4x1xf32, #tpu.memory_space<vmem>>, %arg6: memref<4x1xf32, #tpu.memory_space<vmem>>, %arg7: memref<1x4x256xf32, #tpu.memory_space<vmem>>) attributes {dimension_semantics = [#tpu.dimension_semantics<parallel>, #tpu.dimension_semantics<parallel>], iteration_bounds = array<i64: 2, 1>, scalar_prefetch = 0 : i64, scratch_operands = 0 : i64, tpu.core_type = #tpu.core_type<tc>, window_params = [{transform_indices = @transform_0, window_bounds = array<i64: 1, 4, 256>}, {transform_indices = @transform_1, window_bounds = array<i64: 1, 4, 4>}, {pipeline_mode = #tpu.pipeline_mode<synchronous>, transform_indices = @transform_2, window_bounds = array<i64: 4, 4>}, {pipeline_mode = #tpu.pipeline_mode<synchronous>, transform_indices = @transform_3, window_bounds = array<i64: 4, 1>}, {pipeline_mode = #tpu.pipeline_mode<synchronous>, transform_indices = @transform_4, window_bounds = array<i64: 4, 1>}, {transform_indices = @transform_5, window_bounds = array<i64: 1, 4, 256>}]} {
    %c0 = arith.constant 0 : index
    %c0_0 = arith.constant 0 : index
    %c0_1 = arith.constant 0 : index
    %0 = vector.load %arg2[%c0, %c0_0, %c0_1] : memref<1x4x256xf32, #tpu.memory_space<vmem>>, vector<1x4x256xf32>
    %1 = vector.shape_cast %0 : vector<1x4x256xf32> to vector<4x256xf32>
    %2 = arith.truncf %1 : vector<4x256xf32> to vector<4x256xbf16>
    %c0_2 = arith.constant 0 : index
    %c0_3 = arith.constant 0 : index
    %3 = vector.load %arg4[%c0_2, %c0_3] : memref<4x4xbf16, #tpu.memory_space<vmem>>, vector<4x4xbf16>
    %cst = arith.constant dense<0.000000e+00> : vector<4x256xf32>
    %4 = tpu.matmul %3, %2, %cst {dimension_numbers = #tpu.dot_dimension_numbers<[1], [0], [0], [1], [0, 0, 1, 1], [], []>} : vector<4x4xbf16>, vector<4x256xbf16>, vector<4x256xf32> -> vector<4x256xf32>
    %c0_4 = arith.constant 0 : index
    %c0_5 = arith.constant 0 : index
    %5 = vector.load %arg5[%c0_4, %c0_5] : memref<4x1xf32, #tpu.memory_space<vmem>>, vector<4x1xf32>
    %6 = vector.broadcast %5 : vector<4x1xf32> to vector<4x256xf32>
    %7 = arith.addf %4, %6 : vector<4x256xf32>
    %cst_6 = arith.constant 0.000000e+00 : f32
    %8 = vector.broadcast %cst_6 : f32 to vector<4x256xf32>
    %9 = arith.maximumf %7, %8 : vector<4x256xf32>
    %c0_7 = arith.constant 0 : index
    %c0_8 = arith.constant 0 : index
    %c0_9 = arith.constant 0 : index
    %10 = vector.load %arg3[%c0_7, %c0_8, %c0_9] : memref<1x4x4xbf16, #tpu.memory_space<vmem>>, vector<1x4x4xbf16>
    %11 = vector.shape_cast %10 : vector<1x4x4xbf16> to vector<4x4xbf16>
    %12 = arith.truncf %9 : vector<4x256xf32> to vector<4x256xbf16>
    %cst_10 = arith.constant dense<0.000000e+00> : vector<4x256xf32>
    %13 = tpu.matmul %11, %12, %cst_10 {dimension_numbers = #tpu.dot_dimension_numbers<[1], [0], [0], [1], [0, 0, 1, 1], [], []>} : vector<4x4xbf16>, vector<4x256xbf16>, vector<4x256xf32> -> vector<4x256xf32>
    %c0_11 = arith.constant 0 : index
    %c0_12 = arith.constant 0 : index
    %14 = vector.load %arg6[%c0_11, %c0_12] : memref<4x1xf32, #tpu.memory_space<vmem>>, vector<4x1xf32>
    %15 = vector.broadcast %14 : vector<4x1xf32> to vector<4x256xf32>
    %16 = arith.addf %13, %15 : vector<4x256xf32>
    %17 = arith.addf %1, %16 : vector<4x256xf32>
    %c0_13 = arith.constant 0 : index
    %c0_14 = arith.constant 0 : index
    %c0_15 = arith.constant 0 : index
    %18 = vector.load %arg7[%c0_13, %c0_14, %c0_15] : memref<1x4x256xf32, #tpu.memory_space<vmem>>, vector<1x4x256xf32>
    %19 = vector.shape_cast %18 : vector<1x4x256xf32> to vector<4x256xf32>
    %20 = vector.shape_cast %17 : vector<4x256xf32> to vector<1x4x256xf32>
    tpu.vector_store %arg7[%c0_13, %c0_14, %c0_15], %20 {strides = array<i32>} : memref<1x4x256xf32, #tpu.memory_space<vmem>>, vector<1x4x256xf32>,
    return
  }
  func.func @transform_0(%arg0: i32, %arg1: i32) -> (i32, i32, i32) {
    %c0_i32 = arith.constant 0 : i32
    %c0_i32_0 = arith.constant 0 : i32
    return %arg0, %c0_i32, %arg1 : i32, i32, i32
  }
  func.func @transform_1(%arg0: i32, %arg1: i32) -> (i32, i32, i32) {
    %c0_i32 = arith.constant 0 : i32
    %c0_i32_0 = arith.constant 0 : i32
    %c0_i32_1 = arith.constant 0 : i32
    return %arg0, %c0_i32, %c0_i32_0 : i32, i32, i32
  }
  func.func @transform_2(%arg0: i32, %arg1: i32) -> (i32, i32) {
    %c0_i32 = arith.constant 0 : i32
    %c0_i32_0 = arith.constant 0 : i32
    %c0_i32_1 = arith.constant 0 : i32
    return %c0_i32, %c0_i32_0 : i32, i32
  }
  func.func @transform_3(%arg0: i32, %arg1: i32) -> (i32, i32) {
    %c0_i32 = arith.constant 0 : i32
    %c0_i32_0 = arith.constant 0 : i32
    %c0_i32_1 = arith.constant 0 : i32
    return %c0_i32, %c0_i32_0 : i32, i32
  }
  func.func @transform_4(%arg0: i32, %arg1: i32) -> (i32, i32) {
    %c0_i32 = arith.constant 0 : i32
    %c0_i32_0 = arith.constant 0 : i32
    %c0_i32_1 = arith.constant 0 : i32
    return %c0_i32, %c0_i32_0 : i32, i32
  }
  func.func @transform_5(%arg0: i32, %arg1: i32) -> (i32, i32, i32) {
    %c0_i32 = arith.constant 0 : i32
    %c0_i32_0 = arith.constant 0 : i32
    return %arg0, %c0_i32, %arg1 : i32, i32, i32
  }
}

</mosaic_0001>

<llo_original>
// kernel: glore_unit.3
$region0: #{glore_unit.3}
  #allocation0 [shape = 'u32[]', space=smem, size = 0x4, offset = 0x4, fixed_abs, tag = 'smem constant byte address 0x4 - core index']
  #allocation1 [shape = 'u32[144,128]{1,0:T(1,128)}', space=vmem, size = 0x12000, scoped, tag = 'internal scratch']
  %s0 = inlined_call_operand.vmem [shape: f32[2,4,256], index: 0, kind: input, shape index: {}, may-alias: {0,5}]
  %s1 = inlined_call_operand.vmem [shape: bf16[2,4,4], index: 1, kind: input, shape index: {}]
  %s2 = inlined_call_operand.vmem [shape: bf16[4,4], index: 2, kind: input, shape index: {}]
  %s3 = inlined_call_operand.vmem [shape: f32[4,1], index: 3, kind: input, shape index: {}]
  %s4 = inlined_call_operand.vmem [shape: f32[4,1], index: 4, kind: input, shape index: {}]
  %s5 = inlined_call_operand.vmem [shape: f32[2,4,256], index: 5, kind: output, shape index: {}, may-alias: {0,5}]
  %s6 = sld [smem:[#allocation0]]
  $region53: #{glore_unit.3} parent=0
    _
  %s8 = ssub.s32 1, %s6
  %s9 = scalar_select 0, %s8, %s6
  loop: start=0, step=1, limit=4
  $region2: #{glore_unit.3} parent=0 // loop_pre_header
    _
  $region3: #{glore_unit.3} parent=0 // loop_header
    %s11 = sphi 0, %s15
    %p12 = scmp.ge.s32.totalorder %s11, 4
    %s18 = sphi 0, %s30
    %s19 = sphi 0, %s26
    %s20 = sphi 0, %s18
    %s21 = sphi 0, %s19
    %s22 = sphi 0, %s20
    %s23 = sphi 0, %s21
    %s35 = sphi 0, %s37
    %s38 = sphi 0, %s35
    %s39 = sphi 0, %s38
    %s55 = sphi 0, %s39
    %s61 = sphi 0, %s63
    %s64 = sphi 0, %s61
    %s65 = sphi 0, %s64
    %s81 = sphi 0, %s65
    %s85 = sphi 0, %s85
    %s87 = sphi 0, %s85
    %s88 = sphi 0, %s87
    %s102 = sphi 0, %s88
    %s106 = sphi 0, %s106
    %s108 = sphi 0, %s106
    %s109 = sphi 0, %s108
    %s123 = sphi 0, %s109
    %s127 = sphi 0, %s127
    %s129 = sphi 0, %s127
    %s130 = sphi 0, %s129
    %s144 = sphi 0, %s130
    %s152 = sphi 0, %s154
    %s155 = sphi 0, %s152
    %s156 = sphi 0, %s155
    %s172 = sphi 0, %s156
  $region4: #{glore_unit.3} parent=0 // loop_header_branch
    %14 = sbr.rel (%p12) target = $region8
  $region5: #{glore_unit.3} parent=0 // loop_body
    %s16 = ssub.s32 %s11, 1
    %s17 = ssub.s32 %s11, 2
    %s24 = sadd.s32 1, %s19
    %p25 = scmp.ge.s32.totalorder %s24, 1
    %s26 = scalar_select %p25, 0, %s24
    %s27 = sadd.s32 1, %s18
    %s28 = scalar_select %p25, %s27, %s18
    %p29 = scmp.ge.s32.totalorder %s28, 2
    %s30 = scalar_select %p29, 0, %s28
    %s31 = ssub.s32 %s18, %s30
    %s32 = ssub.s32 %s19, %s26
    %s33 = sor.u32 %s31, %s32
    %p34 = scmp.eq.s32.totalorder %s33, 0
    %s36 = sadd.s32 %s35, 1
    %s37 = scalar_select %p34, %s35, %s36
    %p40 = pneg %p34
    %p41 = scmp.eq.s32.totalorder %s11, 1
    %p42 = por %p40, %p41
    %p43 = scmp.ne.s32.totalorder %s35, %s38
    %p44 = scmp.eq.s32.totalorder %s11, 0
    %p45 = por %p43, %p44
    %p46 = scmp.ne.s32.totalorder %s35, %s38
    %p47 = scmp.eq.s32.totalorder %s16, 1
    %p48 = por %p46, %p47
    %p49 = scmp.ne.s32.totalorder %s38, %s39
    %p50 = scmp.eq.s32.totalorder %s16, 0
    %p51 = por %p49, %p50
    %p52 = scmp.ne.s32.totalorder %s38, %s39
    %p53 = scmp.eq.s32.totalorder %s17, 1
    %p54 = por %p52, %p53
    %p56 = scmp.ne.s32.totalorder %s39, %s55
    %p57 = scmp.eq.s32.totalorder %s17, 0
    %p58 = por %p56, %p57
    %s59 = ssub.s32 %s18, %s30
    %p60 = scmp.eq.s32.totalorder %s59, 0
    %s62 = sadd.s32 %s61, 1
    %s63 = scalar_select %p60, %s61, %s62
    %p66 = pneg %p60
    %p67 = scmp.eq.s32.totalorder %s11, 1
    %p68 = por %p66, %p67
    %p69 = scmp.ne.s32.totalorder %s61, %s64
    %p70 = scmp.eq.s32.totalorder %s11, 0
    %p71 = por %p69, %p70
    %p72 = scmp.ne.s32.totalorder %s61, %s64
    %p73 = scmp.eq.s32.totalorder %s16, 1
    %p74 = por %p72, %p73
    %p75 = scmp.ne.s32.totalorder %s64, %s65
    %p76 = scmp.eq.s32.totalorder %s16, 0
    %p77 = por %p75, %p76
    %p78 = scmp.ne.s32.totalorder %s64, %s65
    %p79 = scmp.eq.s32.totalorder %s17, 1
    %p80 = por %p78, %p79
    %p82 = scmp.ne.s32.totalorder %s65, %s81
    %p83 = scmp.eq.s32.totalorder %s17, 0
    %p84 = por %p82, %p83
    %s86 = sadd.s32 %s85, 1
    %p89 = scmp.eq.s32.totalorder %s11, 1
    %p90 = scmp.ne.s32.totalorder %s85, %s87
    %p91 = scmp.eq.s32.totalorder %s11, 0
    %p92 = por %p90, %p91
    %p93 = scmp.ne.s32.totalorder %s85, %s87
    %p94 = scmp.eq.s32.totalorder %s16, 1
    %p95 = por %p93, %p94
    %p96 = scmp.ne.s32.totalorder %s87, %s88
    %p97 = scmp.eq.s32.totalorder %s16, 0
    %p98 = por %p96, %p97
    %p99 = scmp.ne.s32.totalorder %s87, %s88
    %p100 = scmp.eq.s32.totalorder %s17, 1
    %p101 = por %p99, %p100
    %p103 = scmp.ne.s32.totalorder %s88, %s102
    %p104 = scmp.eq.s32.totalorder %s17, 0
    %p105 = por %p103, %p104
    %s107 = sadd.s32 %s106, 1
    %p110 = scmp.eq.s32.totalorder %s11, 1
    %p111 = scmp.ne.s32.totalorder %s106, %s108
    %p112 = scmp.eq.s32.totalorder %s11, 0
    %p113 = por %p111, %p112
    %p114 = scmp.ne.s32.totalorder %s106, %s108
    %p115 = scmp.eq.s32.totalorder %s16, 1
    %p116 = por %p114, %p115
    %p117 = scmp.ne.s32.totalorder %s108, %s109
    %p118 = scmp.eq.s32.totalorder %s16, 0
    %p119 = por %p117, %p118
    %p120 = scmp.ne.s32.totalorder %s108, %s109
    %p121 = scmp.eq.s32.totalorder %s17, 1
    %p122 = por %p120, %p121
    %p124 = scmp.ne.s32.totalorder %s109, %s123
    %p125 = scmp.eq.s32.totalorder %s17, 0
    %p126 = por %p124, %p125
    %s128 = sadd.s32 %s127, 1
    %p131 = scmp.eq.s32.totalorder %s11, 1
    %p132 = scmp.ne.s32.totalorder %s127, %s129
    %p133 = scmp.eq.s32.totalorder %s11, 0
    %p134 = por %p132, %p133
    %p135 = scmp.ne.s32.totalorder %s127, %s129
    %p136 = scmp.eq.s32.totalorder %s16, 1
    %p137 = por %p135, %p136
    %p138 = scmp.ne.s32.totalorder %s129, %s130
    %p139 = scmp.eq.s32.totalorder %s16, 0
    %p140 = por %p138, %p139
    %p141 = scmp.ne.s32.totalorder %s129, %s130
    %p142 = scmp.eq.s32.totalorder %s17, 1
    %p143 = por %p141, %p142
    %p145 = scmp.ne.s32.totalorder %s130, %s144
    %p146 = scmp.eq.s32.totalorder %s17, 0
    %p147 = por %p145, %p146
    %s148 = ssub.s32 %s18, %s30
    %s149 = ssub.s32 %s19, %s26
    %s150 = sor.u32 %s148, %s149
    %p151 = scmp.eq.s32.totalorder %s150, 0
    %s153 = sadd.s32 %s152, 1
    %s154 = scalar_select %p151, %s152, %s153
    %p157 = pneg %p151
    %p158 = scmp.eq.s32.totalorder %s11, 1
    %p159 = por %p157, %p158
    %p160 = scmp.ne.s32.totalorder %s152, %s155
    %p161 = scmp.eq.s32.totalorder %s11, 0
    %p162 = por %p160, %p161
    %p163 = scmp.ne.s32.totalorder %s152, %s155
    %p164 = scmp.eq.s32.totalorder %s16, 1
    %p165 = por %p163, %p164
    %p166 = scmp.ne.s32.totalorder %s155, %s156
    %p167 = scmp.eq.s32.totalorder %s16, 0
    %p168 = por %p166, %p167
    %p169 = scmp.ne.s32.totalorder %s155, %s156
    %p170 = scmp.eq.s32.totalorder %s17, 1
    %p171 = por %p169, %p170
    %p173 = scmp.ne.s32.totalorder %s156, %s172
    %p174 = scmp.eq.s32.totalorder %s17, 0
    %p175 = por %p173, %p174
    %p176 = scmp.le.s32.totalorder 1, %s11
    %p177 = scmp.lt.s32.totalorder %s11, 3
    %p178 = pnand %p176, %p177
    %p179 = pneg %p178
    // Predicated region
    $region9: #{glore_unit.3} parent=5 // pred_check
      _
    $region10: #{glore_unit.3} parent=5 // pred_check_branch
      %181 = sbr.rel (%p178) target = $region12
    $region11: #{glore_unit.3} parent=5 // pred_region
      %s182 = ssub.s32 %s11, 1
      // Predicated region
      $region13: #{glore_unit.3} parent=11 // pred_check
        %p183 = pneg %p98
      $region14: #{glore_unit.3} parent=11 // pred_check_branch
        %185 = sbr.rel (%p183) target = $region16
      $region15: #{glore_unit.3} parent=11 // pred_region
        _
      $region16: #{glore_unit.3} parent=11 // pred_fallthru
        _
      // Predicated region
      $region17: #{glore_unit.3} parent=11 // pred_check
        %p186 = pneg %p119
      $region18: #{glore_unit.3} parent=11 // pred_check_branch
        %188 = sbr.rel (%p186) target = $region20
      $region19: #{glore_unit.3} parent=11 // pred_region
        _
      $region20: #{glore_unit.3} parent=11 // pred_fallthru
        _
      // Predicated region
      $region21: #{glore_unit.3} parent=11 // pred_check
        %p189 = pneg %p140
      $region22: #{glore_unit.3} parent=11 // pred_check_branch
        %191 = sbr.rel (%p189) target = $region24
      $region23: #{glore_unit.3} parent=11 // pred_region
        _
      $region24: #{glore_unit.3} parent=11 // pred_fallthru
        _
    $region12: #{glore_unit.3} parent=5 // pred_fallthru
      _
    %p192 = scmp.lt.s32.totalorder %s11, 2
    // Predicated region
    $region25: #{glore_unit.3} parent=5 // pred_check
      %p193 = pneg %p192
    $region26: #{glore_unit.3} parent=5 // pred_check_branch
      %195 = sbr.rel (%p193) target = $region28
    $region27: #{glore_unit.3} parent=5 // pred_region
      // Predicated region
      $region29: #{glore_unit.3} parent=27 // pred_check
        %p196 = pneg %p45
      $region30: #{glore_unit.3} parent=27 // pred_check_branch
        %198 = sbr.rel (%p196) target = $region32
      $region31: #{glore_unit.3} parent=27 // pred_region
        %s199 = smul.u32 2, %s19
        %p200 = scmp.lt.s32.totalorder %s18, 1
        %s201 = scalar_select %p200, %s18, 1
        %p202 = scmp.lt.s32.totalorder %s199, 1
        %s203 = scalar_select %p202, %s199, 1
        %s204 = smul.addr %s201, 2
        %s205 = sadd.s32 %s203, %s204
        %s206 = smul.addr %s205, 4
        %s207 = scalar_lea.vmem %s0, %s206
        %s208 = smul.u32 2, %s19
      $region32: #{glore_unit.3} parent=27 // pred_fallthru
        _
      // Predicated region
      $region33: #{glore_unit.3} parent=27 // pred_check
        %p209 = pneg %p71
      $region34: #{glore_unit.3} parent=27 // pred_check_branch
        %211 = sbr.rel (%p209) target = $region36
      $region35: #{glore_unit.3} parent=27 // pred_region
        %p212 = scmp.lt.s32.totalorder %s18, 1
        %s213 = scalar_select %p212, %s18, 1
        %s214 = smul.addr %s213, 2
        %s215 = scalar_lea.vmem %s1, %s214
      $region36: #{glore_unit.3} parent=27 // pred_fallthru
        _
    $region28: #{glore_unit.3} parent=5 // pred_fallthru
      _
    %p216 = scmp.le.s32.totalorder 1, %s11
    %p217 = scmp.lt.s32.totalorder %s11, 3
    %p218 = pnand %p216, %p217
    %p219 = pneg %p218
    // Predicated region
    $region37: #{glore_unit.3} parent=5 // pred_check
      _
    $region38: #{glore_unit.3} parent=5 // pred_check_branch
      %221 = sbr.rel (%p218) target = $region40
    $region39: #{glore_unit.3} parent=5 // pred_region
      %s222 = ssub.s32 %s11, 1
      %s223 = smul.u32 2, %s21
      %p224 = scmp.lt.s32.totalorder %s20, 1
      %s225 = scalar_select %p224, %s20, 1
      %p226 = scmp.lt.s32.totalorder %s223, 1
      %s227 = scalar_select %p226, %s223, 1
      %s228 = smul.addr %s225, 2
      %s229 = sadd.s32 %s227, %s228
      %s230 = smul.addr %s229, 4
      %s231 = scalar_lea.vmem %s0, %s230
      %p232 = pneg %p51
      %p233 = pneg %p48
      %p234 = scmp.lt.s32.totalorder %s20, 1
      %s235 = scalar_select %p234, %s20, 1
      %s236 = smul.addr %s235, 2
      %s237 = scalar_lea.vmem %s1, %s236
      %p238 = pneg %p77
      %p239 = pneg %p74
      %p240 = pneg %p98
      %p241 = pneg %p95
      %p242 = pneg %p119
      %p243 = pneg %p116
      %p244 = pneg %p140
      %p245 = pneg %p137
      %p246 = pneg %p168
      %p247 = pneg %p165
      %s248 = smul.u32 2, %s21
      %p249 = scmp.lt.s32.totalorder %s20, 1
      %s250 = scalar_select %p249, %s20, 1
      %p251 = scmp.lt.s32.totalorder %s248, 1
      %s252 = scalar_select %p251, %s248, 1
      %s253 = smul.addr %s250, 2
      %s254 = sadd.s32 %s252, %s253
      %s255 = smul.addr %s254, 4
      %s256 = scalar_lea.vmem %s5, %s255
      %s257 = smul.u32 2, %s21
      %p258 = scmp.lt.s32.totalorder %s20, 1
      %s259 = scalar_select %p258, %s20, 1
      %p260 = scmp.lt.s32.totalorder %s257, 1
      %s261 = scalar_select %p260, %s257, 1
      %s262 = smul.addr %s259, 2
      %s263 = sadd.s32 %s261, %s262
      %s264 = smul.addr %s263, 4
      %s265 = scalar_lea.vmem %s0, %s264
      %s266 = smul.u32 2, %s21
      %p267 = scmp.lt.s32.totalorder %s20, 1
      %s268 = scalar_select %p267, %s20, 1
      %s269 = smul.addr %s268, 2
      %s270 = scalar_lea.vmem %s1, %s269
      %s271 = smul.u32 2, %s21
      %p272 = scmp.lt.s32.totalorder %s20, 1
      %s273 = scalar_select %p272, %s20, 1
      %p274 = scmp.lt.s32.totalorder %s271, 1
      %s275 = scalar_select %p274, %s271, 1
      %s276 = smul.addr %s273, 2
      %s277 = sadd.s32 %s275, %s276
      %s278 = smul.addr %s277, 4
      %s279 = scalar_lea.vmem %s5, %s278
      %s280 = smul.u32 2, %s21
      %v282 = vld [vmem:[%s265] sm:$0xff]
      %v284 = vcombine.high %v282, %v282
      %v286 = vpack.c.bf16 %v282, %v282
      %v287 = vpack.c.bf16 %v284, %v284
      %v288 = vld [vmem:[%s2] sm:$0x3]
      %v289 = vld [vmem:[%s3] sm:$0xf]
      %291 = vset.pattern.permute.xlu0 0
      %292 = vperm.xlu0 %291, %v289
      %v293 = vpop.permute.xlu0 %292
      %vm295 = vcmask 31744
      %v297 = vsel %vm295, %v288, 0
      %vm299 = vcmask 1041408
      %v301 = vsel %vm299, %v286, 0
      %v304 = vsel %vm299, %v287, 0
      %306 = vmatprep.subr.bf16.mxu0 0
      %307 = vmatpush1.bf16.msra.mxu0 0
      %308 = vmatprep.subr.bf16.mxu0 0
      %309 = vmatpush1.bf16.msra.mxu0 0
      %310 = vmatprep.subr.bf16.mxu0 0
      %311 = vmatpush1.bf16.msra.mxu0 0
      %312 = vmatprep.subr.bf16.mxu0 0
      %313 = vmatpush1.bf16.msra.mxu0 0
      %314 = vmatprep.subr.bf16.mxu0 0
      %315 = vmatpush1.bf16.msra.mxu0 0
      %316 = vmatprep.subr.bf16.mxu0 0
      %317 = vmatpush1.bf16.msra.mxu0 0
      %318 = vmatprep.subr.bf16.mxu0 0
      %319 = vmatpush1.bf16.msra.mxu0 0
      %320 = vmatprep.subr.bf16.mxu0 %v304
      %321 = vmatpush1.bf16.msra.mxu0 %v301
      %322 = vmatprep.subr.bf16.mxu0 0
      %323 = vmatpush2.bf16.msra.mxu0 0
      %324 = vmatprep.subr.bf16.mxu0 0
      %325 = vmatpush2.bf16.msra.mxu0 0
      %326 = vmatprep.subr.bf16.mxu0 0
      %327 = vmatpush2.bf16.msra.mxu0 0
      %328 = vmatprep.subr.bf16.mxu0 0
      %329 = vmatpush2.bf16.msra.mxu0 0
      %330 = vmatprep.subr.bf16.mxu0 0
      %331 = vmatpush2.bf16.msra.mxu0 0
      %332 = vmatprep.subr.bf16.mxu0 0
      %333 = vmatpush2.bf16.msra.mxu0 0
      %334 = vmatprep.subr.bf16.mxu0 0
      %335 = vmatpush2.bf16.msra.mxu0 0
      %336 = vmatprep.subr.bf16.mxu0 0
      %337 = vmatpush2.bf16.msra.mxu0 0
      %338 = vmatprep.mubr.bf16.mxu0 0
      %339 = vmatmul.mubr.bf16.gmra.mxu0 %v297
      %v340 = vpop.f32.mrf.mxu0
      %v341 = vadd.f32 %v293, %v340
      %v342 = vpop.f32.mrf.mxu0
      %v343 = vadd.f32 %v293, %v342
      %v344 = vpop.f32.mrf.mxu0
      %v345 = vpop.f32.mrf.mxu0
      %346 = vdwg.mxu0
      %v347 = vmax.f32 %v341, 0.0
      %v348 = vmax.f32 %v343, 0.0
      %v349 = vld [vmem:[%s270] sm:$0x3]
      %v350 = vpack.c.bf16 %v347, %v347
      %v351 = vpack.c.bf16 %v348, %v348
      %v352 = vld [vmem:[%s4] sm:$0xf]
      %354 = vset.pattern.permute.xlu0 0
      %355 = vperm.xlu0 %354, %v352
      %v356 = vpop.permute.xlu0 %355
      %v359 = vsel %vm295, %v349, 0
      %v362 = vsel %vm299, %v350, 0
      %v365 = vsel %vm299, %v351, 0
      %367 = vmatprep.subr.bf16.mxu0 0
      %368 = vmatpush1.bf16.msra.mxu0 0
      %369 = vmatprep.subr.bf16.mxu0 0
      %370 = vmatpush1.bf16.msra.mxu0 0
      %371 = vmatprep.subr.bf16.mxu0 0
      %372 = vmatpush1.bf16.msra.mxu0 0
      %373 = vmatprep.subr.bf16.mxu0 0
      %374 = vmatpush1.bf16.msra.mxu0 0
      %375 = vmatprep.subr.bf16.mxu0 0
      %376 = vmatpush1.bf16.msra.mxu0 0
      %377 = vmatprep.subr.bf16.mxu0 0
      %378 = vmatpush1.bf16.msra.mxu0 0
      %379 = vmatprep.subr.bf16.mxu0 0
      %380 = vmatpush1.bf16.msra.mxu0 0
      %381 = vmatprep.subr.bf16.mxu0 %v365
      %382 = vmatpush1.bf16.msra.mxu0 %v362
      %383 = vmatprep.subr.bf16.mxu0 0
      %384 = vmatpush2.bf16.msra.mxu0 0
      %385 = vmatprep.subr.bf16.mxu0 0
      %386 = vmatpush2.bf16.msra.mxu0 0
      %387 = vmatprep.subr.bf16.mxu0 0
      %388 = vmatpush2.bf16.msra.mxu0 0
      %389 = vmatprep.subr.bf16.mxu0 0
      %390 = vmatpush2.bf16.msra.mxu0 0
      %391 = vmatprep.subr.bf16.mxu0 0
      %392 = vmatpush2.bf16.msra.mxu0 0
      %393 = vmatprep.subr.bf16.mxu0 0
      %394 = vmatpush2.bf16.msra.mxu0 0
      %395 = vmatprep.subr.bf16.mxu0 0
      %396 = vmatpush2.bf16.msra.mxu0 0
      %397 = vmatprep.subr.bf16.mxu0 0
      %398 = vmatpush2.bf16.msra.mxu0 0
      %399 = vmatprep.mubr.bf16.mxu0 0
      %400 = vmatmul.mubr.bf16.gmra.mxu0 %v359
      %v401 = vpop.f32.mrf.mxu0
      %v402 = vadd.f32 %v356, %v401
      %v403 = vpop.f32.mrf.mxu0
      %v404 = vadd.f32 %v356, %v403
      %v405 = vpop.f32.mrf.mxu0
      %v406 = vpop.f32.mrf.mxu0
      %407 = vdwg.mxu0
      %v410 = vcombine.low %v402, %v404
      %v412 = vadd.f32 %v282, %v410
      %413 = vst [vmem:[%s279] sm:$0xff] %v412
      %s414 = smul.u32 2, %s21
      %p415 = scmp.lt.s32.totalorder %s20, 1
      %s416 = scalar_select %p415, %s20, 1
      %p417 = scmp.lt.s32.totalorder %s414, 1
      %s418 = scalar_select %p417, %s414, 1
      %s419 = smul.addr %s416, 2
      %s420 = sadd.s32 %s418, %s419
      %s421 = smul.addr %s420, 4
      %s422 = scalar_lea.vmem %s5, %s421
      // Predicated region
      $region41: #{glore_unit.3} parent=39 // pred_check
        %p423 = pneg %p165
      $region42: #{glore_unit.3} parent=39 // pred_check_branch
        %425 = sbr.rel (%p423) target = $region44
      $region43: #{glore_unit.3} parent=39 // pred_region
        %s426 = smul.u32 2, %s21
      $region44: #{glore_unit.3} parent=39 // pred_fallthru
        _
    $region40: #{glore_unit.3} parent=5 // pred_fallthru
      _
    %p427 = scmp.le.s32.totalorder 2, %s11
    // Predicated region
    $region45: #{glore_unit.3} parent=5 // pred_check
      %p428 = pneg %p427
    $region46: #{glore_unit.3} parent=5 // pred_check_branch
      %430 = sbr.rel (%p428) target = $region48
    $region47: #{glore_unit.3} parent=5 // pred_region
      %s431 = ssub.s32 %s11, 2
      // Predicated region
      $region49: #{glore_unit.3} parent=47 // pred_check
        %p432 = pneg %p171
      $region50: #{glore_unit.3} parent=47 // pred_check_branch
        %434 = sbr.rel (%p432) target = $region52
      $region51: #{glore_unit.3} parent=47 // pred_region
        %s435 = smul.u32 2, %s23
        %p436 = scmp.lt.s32.totalorder %s22, 1
        %s437 = scalar_select %p436, %s22, 1
        %p438 = scmp.lt.s32.totalorder %s435, 1
        %s439 = scalar_select %p438, %s435, 1
        %s440 = smul.addr %s437, 2
        %s441 = sadd.s32 %s439, %s440
        %s442 = smul.addr %s441, 4
        %s443 = scalar_lea.vmem %s5, %s442
      $region52: #{glore_unit.3} parent=47 // pred_fallthru
        _
    $region48: #{glore_unit.3} parent=5 // pred_fallthru
      _
  $region6: #{glore_unit.3} parent=0 // loop_footer
    %s15 = sadd.s32 1, %s11
  $region7: #{glore_unit.3} parent=0 // loop_footer_branch
    %10 = sbr.rel target = $region3
  $region8: #{glore_unit.3} parent=0 // loop_exit
    _

// kernel: glore_unit.2
$region0: #{glore_unit.2}
  #allocation0 [shape = 'u32[]', space=smem, size = 0x4, offset = 0x4, fixed_abs, tag = 'smem constant byte address 0x4 - core index']
  #allocation1 [shape = 'u32[144,128]{1,0:T(1,128)}', space=vmem, size = 0x12000, scoped, tag = 'internal scratch']
  #allocation2 [shape = 'f32[8,4]{1,0:T(8,128)}', space=vmem, size = 0x1000, scoped, tag = 'scratch operand']
  %s0 = inlined_call_operand.vmem [shape: f32[2,4,256], index: 0, kind: input, shape index: {}]
  %s1 = inlined_call_operand.vmem [shape: bf16[8,4], index: 1, kind: input, shape index: {}]
  %s2 = inlined_call_operand.vmem [shape: f32[8,1], index: 2, kind: input, shape index: {}]
  %s3 = inlined_call_operand.vmem [shape: bf16[4,4], index: 3, kind: input, shape index: {}]
  %s4 = inlined_call_operand.vmem [shape: f32[4,1], index: 4, kind: input, shape index: {}]
  %s5 = inlined_call_operand.vmem [shape: bf16[4,4], index: 5, kind: input, shape index: {}]
  %s6 = inlined_call_operand.vmem [shape: f32[1,4], index: 6, kind: input, shape index: {}]
  %s7 = inlined_call_operand.vmem [shape: bf16[8,8], index: 7, kind: input, shape index: {}]
  %s8 = inlined_call_operand.vmem [shape: bf16[4,4], index: 8, kind: input, shape index: {}]
  %s9 = inlined_call_operand.vmem [shape: f32[1,4], index: 9, kind: input, shape index: {}]
  %s10 = inlined_call_operand.vmem [shape: bf16[8,8], index: 10, kind: input, shape index: {}]
  %s11 = inlined_call_operand.vmem [shape: bf16[4,8], index: 11, kind: input, shape index: {}]
  %s12 = inlined_call_operand.vmem [shape: bf16[2,4,4], index: 12, kind: output, shape index: {}]
  %s13 = sld [smem:[#allocation0]]
  $region89: #{glore_unit.2} parent=0
    _
  %s15 = ssub.s32 1, %s13
  %s16 = scalar_select 0, %s15, %s13
  loop: start=0, step=1, limit=4
  $region2: #{glore_unit.2} parent=0 // loop_pre_header
    _
  $region3: #{glore_unit.2} parent=0 // loop_header
    %s18 = sphi 0, %s22
    %p19 = scmp.ge.s32.totalorder %s18, 4
    %s25 = sphi 0, %s37
    %s26 = sphi 0, %s33
    %s27 = sphi 0, %s25
    %s28 = sphi 0, %s26
    %s29 = sphi 0, %s27
    %s30 = sphi 0, %s28
    %s42 = sphi 0, %s44
    %s45 = sphi 0, %s42
    %s46 = sphi 0, %s45
    %s62 = sphi 0, %s46
    %s66 = sphi 0, %s66
    %s68 = sphi 0, %s66
    %s69 = sphi 0, %s68
    %s83 = sphi 0, %s69
    %s87 = sphi 0, %s87
    %s89 = sphi 0, %s87
    %s90 = sphi 0, %s89
    %s104 = sphi 0, %s90
    %s108 = sphi 0, %s108
    %s110 = sphi 0, %s108
    %s111 = sphi 0, %s110
    %s125 = sphi 0, %s111
    %s129 = sphi 0, %s129
    %s131 = sphi 0, %s129
    %s132 = sphi 0, %s131
    %s146 = sphi 0, %s132
    %s150 = sphi 0, %s150
    %s152 = sphi 0, %s150
    %s153 = sphi 0, %s152
    %s167 = sphi 0, %s153
    %s171 = sphi 0, %s171
    %s173 = sphi 0, %s171
    %s174 = sphi 0, %s173
    %s188 = sphi 0, %s174
    %s192 = sphi 0, %s192
    %s194 = sphi 0, %s192
    %s195 = sphi 0, %s194
    %s209 = sphi 0, %s195
    %s213 = sphi 0, %s213
    %s215 = sphi 0, %s213
    %s216 = sphi 0, %s215
    %s230 = sphi 0, %s216
    %s234 = sphi 0, %s234
    %s236 = sphi 0, %s234
    %s237 = sphi 0, %s236
    %s251 = sphi 0, %s237
    %s255 = sphi 0, %s255
    %s257 = sphi 0, %s255
    %s258 = sphi 0, %s257
    %s272 = sphi 0, %s258
    %s276 = sphi 0, %s276
    %s278 = sphi 0, %s276
    %s279 = sphi 0, %s278
    %s293 = sphi 0, %s279
    %s299 = sphi 0, %s301
    %s302 = sphi 0, %s299
    %s303 = sphi 0, %s302
    %s319 = sphi 0, %s303
  $region4: #{glore_unit.2} parent=0 // loop_header_branch
    %21 = sbr.rel (%p19) target = $region8
  $region5: #{glore_unit.2} parent=0 // loop_body
    %s23 = ssub.s32 %s18, 1
    %s24 = ssub.s32 %s18, 2
    %s31 = sadd.s32 1, %s26
    %p32 = scmp.ge.s32.totalorder %s31, 1
    %s33 = scalar_select %p32, 0, %s31
    %s34 = sadd.s32 1, %s25
    %s35 = scalar_select %p32, %s34, %s25
    %p36 = scmp.ge.s32.totalorder %s35, 2
    %s37 = scalar_select %p36, 0, %s35
    %s38 = ssub.s32 %s25, %s37
    %s39 = ssub.s32 %s26, %s33
    %s40 = sor.u32 %s38, %s39
    %p41 = scmp.eq.s32.totalorder %s40, 0
    %s43 = sadd.s32 %s42, 1
    %s44 = scalar_select %p41, %s42, %s43
    %p47 = pneg %p41
    %p48 = scmp.eq.s32.totalorder %s18, 1
    %p49 = por %p47, %p48
    %p50 = scmp.ne.s32.totalorder %s42, %s45
    %p51 = scmp.eq.s32.totalorder %s18, 0
    %p52 = por %p50, %p51
    %p53 = scmp.ne.s32.totalorder %s42, %s45
    %p54 = scmp.eq.s32.totalorder %s23, 1
    %p55 = por %p53, %p54
    %p56 = scmp.ne.s32.totalorder %s45, %s46
    %p57 = scmp.eq.s32.totalorder %s23, 0
    %p58 = por %p56, %p57
    %p59 = scmp.ne.s32.totalorder %s45, %s46
    %p60 = scmp.eq.s32.totalorder %s24, 1
    %p61 = por %p59, %p60
    %p63 = scmp.ne.s32.totalorder %s46, %s62
    %p64 = scmp.eq.s32.totalorder %s24, 0
    %p65 = por %p63, %p64
    %s67 = sadd.s32 %s66, 1
    %p70 = scmp.eq.s32.totalorder %s18, 1
    %p71 = scmp.ne.s32.totalorder %s66, %s68
    %p72 = scmp.eq.s32.totalorder %s18, 0
    %p73 = por %p71, %p72
    %p74 = scmp.ne.s32.totalorder %s66, %s68
    %p75 = scmp.eq.s32.totalorder %s23, 1
    %p76 = por %p74, %p75
    %p77 = scmp.ne.s32.totalorder %s68, %s69
    %p78 = scmp.eq.s32.totalorder %s23, 0
    %p79 = por %p77, %p78
    %p80 = scmp.ne.s32.totalorder %s68, %s69
    %p81 = scmp.eq.s32.totalorder %s24, 1
    %p82 = por %p80, %p81
    %p84 = scmp.ne.s32.totalorder %s69, %s83
    %p85 = scmp.eq.s32.totalorder %s24, 0
    %p86 = por %p84, %p85
    %s88 = sadd.s32 %s87, 1
    %p91 = scmp.eq.s32.totalorder %s18, 1
    %p92 = scmp.ne.s32.totalorder %s87, %s89
    %p93 = scmp.eq.s32.totalorder %s18, 0
    %p94 = por %p92, %p93
    %p95 = scmp.ne.s32.totalorder %s87, %s89
    %p96 = scmp.eq.s32.totalorder %s23, 1
    %p97 = por %p95, %p96
    %p98 = scmp.ne.s32.totalorder %s89, %s90
    %p99 = scmp.eq.s32.totalorder %s23, 0
    %p100 = por %p98, %p99
    %p101 = scmp.ne.s32.totalorder %s89, %s90
    %p102 = scmp.eq.s32.totalorder %s24, 1
    %p103 = por %p101, %p102
    %p105 = scmp.ne.s32.totalorder %s90, %s104
    %p106 = scmp.eq.s32.totalorder %s24, 0
    %p107 = por %p105, %p106
    %s109 = sadd.s32 %s108, 1
    %p112 = scmp.eq.s32.totalorder %s18, 1
    %p113 = scmp.ne.s32.totalorder %s108, %s110
    %p114 = scmp.eq.s32.totalorder %s18, 0
    %p115 = por %p113, %p114
    %p116 = scmp.ne.s32.totalorder %s108, %s110
    %p117 = scmp.eq.s32.totalorder %s23, 1
    %p118 = por %p116, %p117
    %p119 = scmp.ne.s32.totalorder %s110, %s111
    %p120 = scmp.eq.s32.totalorder %s23, 0
    %p121 = por %p119, %p120
    %p122 = scmp.ne.s32.totalorder %s110, %s111
    %p123 = scmp.eq.s32.totalorder %s24, 1
    %p124 = por %p122, %p123
    %p126 = scmp.ne.s32.totalorder %s111, %s125
    %p127 = scmp.eq.s32.totalorder %s24, 0
    %p128 = por %p126, %p127
    %s130 = sadd.s32 %s129, 1
    %p133 = scmp.eq.s32.totalorder %s18, 1
    %p134 = scmp.ne.s32.totalorder %s129, %s131
    %p135 = scmp.eq.s32.totalorder %s18, 0
    %p136 = por %p134, %p135
    %p137 = scmp.ne.s32.totalorder %s129, %s131
    %p138 = scmp.eq.s32.totalorder %s23, 1
    %p139 = por %p137, %p138
    %p140 = scmp.ne.s32.totalorder %s131, %s132
    %p141 = scmp.eq.s32.totalorder %s23, 0
    %p142 = por %p140, %p141
    %p143 = scmp.ne.s32.totalorder %s131, %s132
    %p144 = scmp.eq.s32.totalorder %s24, 1
    %p145 = por %p143, %p144
    %p147 = scmp.ne.s32.totalorder %s132, %s146
    %p148 = scmp.eq.s32.totalorder %s24, 0
    %p149 = por %p147, %p148
    %s151 = sadd.s32 %s150, 1
    %p154 = scmp.eq.s32.totalorder %s18, 1
    %p155 = scmp.ne.s32.totalorder %s150, %s152
    %p156 = scmp.eq.s32.totalorder %s18, 0
    %p157 = por %p155, %p156
    %p158 = scmp.ne.s32.totalorder %s150, %s152
    %p159 = scmp.eq.s32.totalorder %s23, 1
    %p160 = por %p158, %p159
    %p161 = scmp.ne.s32.totalorder %s152, %s153
    %p162 = scmp.eq.s32.totalorder %s23, 0
    %p163 = por %p161, %p162
    %p164 = scmp.ne.s32.totalorder %s152, %s153
    %p165 = scmp.eq.s32.totalorder %s24, 1
    %p166 = por %p164, %p165
    %p168 = scmp.ne.s32.totalorder %s153, %s167
    %p169 = scmp.eq.s32.totalorder %s24, 0
    %p170 = por %p168, %p169
    %s172 = sadd.s32 %s171, 1
    %p175 = scmp.eq.s32.totalorder %s18, 1
    %p176 = scmp.ne.s32.totalorder %s171, %s173
    %p177 = scmp.eq.s32.totalorder %s18, 0
    %p178 = por %p176, %p177
    %p179 = scmp.ne.s32.totalorder %s171, %s173
    %p180 = scmp.eq.s32.totalorder %s23, 1
    %p181 = por %p179, %p180
    %p182 = scmp.ne.s32.totalorder %s173, %s174
    %p183 = scmp.eq.s32.totalorder %s23, 0
    %p184 = por %p182, %p183
    %p185 = scmp.ne.s32.totalorder %s173, %s174
    %p186 = scmp.eq.s32.totalorder %s24, 1
    %p187 = por %p185, %p186
    %p189 = scmp.ne.s32.totalorder %s174, %s188
    %p190 = scmp.eq.s32.totalorder %s24, 0
    %p191 = por %p189, %p190
    %s193 = sadd.s32 %s192, 1
    %p196 = scmp.eq.s32.totalorder %s18, 1
    %p197 = scmp.ne.s32.totalorder %s192, %s194
    %p198 = scmp.eq.s32.totalorder %s18, 0
    %p199 = por %p197, %p198
    %p200 = scmp.ne.s32.totalorder %s192, %s194
    %p201 = scmp.eq.s32.totalorder %s23, 1
    %p202 = por %p200, %p201
    %p203 = scmp.ne.s32.totalorder %s194, %s195
    %p204 = scmp.eq.s32.totalorder %s23, 0
    %p205 = por %p203, %p204
    %p206 = scmp.ne.s32.totalorder %s194, %s195
    %p207 = scmp.eq.s32.totalorder %s24, 1
    %p208 = por %p206, %p207
    %p210 = scmp.ne.s32.totalorder %s195, %s209
    %p211 = scmp.eq.s32.totalorder %s24, 0
    %p212 = por %p210, %p211
    %s214 = sadd.s32 %s213, 1
    %p217 = scmp.eq.s32.totalorder %s18, 1
    %p218 = scmp.ne.s32.totalorder %s213, %s215
    %p219 = scmp.eq.s32.totalorder %s18, 0
    %p220 = por %p218, %p219
    %p221 = scmp.ne.s32.totalorder %s213, %s215
    %p222 = scmp.eq.s32.totalorder %s23, 1
    %p223 = por %p221, %p222
    %p224 = scmp.ne.s32.totalorder %s215, %s216
    %p225 = scmp.eq.s32.totalorder %s23, 0
    %p226 = por %p224, %p225
    %p227 = scmp.ne.s32.totalorder %s215, %s216
    %p228 = scmp.eq.s32.totalorder %s24, 1
    %p229 = por %p227, %p228
    %p231 = scmp.ne.s32.totalorder %s216, %s230
    %p232 = scmp.eq.s32.totalorder %s24, 0
    %p233 = por %p231, %p232
    %s235 = sadd.s32 %s234, 1
    %p238 = scmp.eq.s32.totalorder %s18, 1
    %p239 = scmp.ne.s32.totalorder %s234, %s236
    %p240 = scmp.eq.s32.totalorder %s18, 0
    %p241 = por %p239, %p240
    %p242 = scmp.ne.s32.totalorder %s234, %s236
    %p243 = scmp.eq.s32.totalorder %s23, 1
    %p244 = por %p242, %p243
    %p245 = scmp.ne.s32.totalorder %s236, %s237
    %p246 = scmp.eq.s32.totalorder %s23, 0
    %p247 = por %p245, %p246
    %p248 = scmp.ne.s32.totalorder %s236, %s237
    %p249 = scmp.eq.s32.totalorder %s24, 1
    %p250 = por %p248, %p249
    %p252 = scmp.ne.s32.totalorder %s237, %s251
    %p253 = scmp.eq.s32.totalorder %s24, 0
    %p254 = por %p252, %p253
    %s256 = sadd.s32 %s255, 1
    %p259 = scmp.eq.s32.totalorder %s18, 1
    %p260 = scmp.ne.s32.totalorder %s255, %s257
    %p261 = scmp.eq.s32.totalorder %s18, 0
    %p262 = por %p260, %p261
    %p263 = scmp.ne.s32.totalorder %s255, %s257
    %p264 = scmp.eq.s32.totalorder %s23, 1
    %p265 = por %p263, %p264
    %p266 = scmp.ne.s32.totalorder %s257, %s258
    %p267 = scmp.eq.s32.totalorder %s23, 0
    %p268 = por %p266, %p267
    %p269 = scmp.ne.s32.totalorder %s257, %s258
    %p270 = scmp.eq.s32.totalorder %s24, 1
    %p271 = por %p269, %p270
    %p273 = scmp.ne.s32.totalorder %s258, %s272
    %p274 = scmp.eq.s32.totalorder %s24, 0
    %p275 = por %p273, %p274
    %s277 = sadd.s32 %s276, 1
    %p280 = scmp.eq.s32.totalorder %s18, 1
    %p281 = scmp.ne.s32.totalorder %s276, %s278
    %p282 = scmp.eq.s32.totalorder %s18, 0
    %p283 = por %p281, %p282
    %p284 = scmp.ne.s32.totalorder %s276, %s278
    %p285 = scmp.eq.s32.totalorder %s23, 1
    %p286 = por %p284, %p285
    %p287 = scmp.ne.s32.totalorder %s278, %s279
    %p288 = scmp.eq.s32.totalorder %s23, 0
    %p289 = por %p287, %p288
    %p290 = scmp.ne.s32.totalorder %s278, %s279
    %p291 = scmp.eq.s32.totalorder %s24, 1
    %p292 = por %p290, %p291
    %p294 = scmp.ne.s32.totalorder %s279, %s293
    %p295 = scmp.eq.s32.totalorder %s24, 0
    %p296 = por %p294, %p295
    %s297 = ssub.s32 %s25, %s37
    %p298 = scmp.eq.s32.totalorder %s297, 0
    %s300 = sadd.s32 %s299, 1
    %s301 = scalar_select %p298, %s299, %s300
    %p304 = pneg %p298
    %p305 = scmp.eq.s32.totalorder %s18, 1
    %p306 = por %p304, %p305
    %p307 = scmp.ne.s32.totalorder %s299, %s302
    %p308 = scmp.eq.s32.totalorder %s18, 0
    %p309 = por %p307, %p308
    %p310 = scmp.ne.s32.totalorder %s299, %s302
    %p311 = scmp.eq.s32.totalorder %s23, 1
    %p312 = por %p310, %p311
    %p313 = scmp.ne.s32.totalorder %s302, %s303
    %p314 = scmp.eq.s32.totalorder %s23, 0
    %p315 = por %p313, %p314
    %p316 = scmp.ne.s32.totalorder %s302, %s303
    %p317 = scmp.eq.s32.totalorder %s24, 1
    %p318 = por %p316, %p317
    %p320 = scmp.ne.s32.totalorder %s303, %s319
    %p321 = scmp.eq.s32.totalorder %s24, 0
    %p322 = por %p320, %p321
    %p323 = scmp.le.s32.totalorder 1, %s18
    %p324 = scmp.lt.s32.totalorder %s18, 3
    %p325 = pnand %p323, %p324
    %p326 = pneg %p325
    // Predicated region
    $region9: #{glore_unit.2} parent=5 // pred_check
      _
    $region10: #{glore_unit.2} parent=5 // pred_check_branch
      %328 = sbr.rel (%p325) target = $region12
    $region11: #{glore_unit.2} parent=5 // pred_region
      %s329 = ssub.s32 %s18, 1
      // Predicated region
      $region13: #{glore_unit.2} parent=11 // pred_check
        %p330 = pneg %p79
      $region14: #{glore_unit.2} parent=11 // pred_check_branch
        %332 = sbr.rel (%p330) target = $region16
      $region15: #{glore_unit.2} parent=11 // pred_region
        _
      $region16: #{glore_unit.2} parent=11 // pred_fallthru
        _
      // Predicated region
      $region17: #{glore_unit.2} parent=11 // pred_check
        %p333 = pneg %p100
      $region18: #{glore_unit.2} parent=11 // pred_check_branch
        %335 = sbr.rel (%p333) target = $region20
      $region19: #{glore_unit.2} parent=11 // pred_region
        _
      $region20: #{glore_unit.2} parent=11 // pred_fallthru
        _
      // Predicated region
      $region21: #{glore_unit.2} parent=11 // pred_check
        %p336 = pneg %p121
      $region22: #{glore_unit.2} parent=11 // pred_check_branch
        %338 = sbr.rel (%p336) target = $region24
      $region23: #{glore_unit.2} parent=11 // pred_region
        _
      $region24: #{glore_unit.2} parent=11 // pred_fallthru
        _
      // Predicated region
      $region25: #{glore_unit.2} parent=11 // pred_check
        %p339 = pneg %p142
      $region26: #{glore_unit.2} parent=11 // pred_check_branch
        %341 = sbr.rel (%p339) target = $region28
      $region27: #{glore_unit.2} parent=11 // pred_region
        _
      $region28: #{glore_unit.2} parent=11 // pred_fallthru
        _
      // Predicated region
      $region29: #{glore_unit.2} parent=11 // pred_check
        %p342 = pneg %p163
      $region30: #{glore_unit.2} parent=11 // pred_check_branch
        %344 = sbr.rel (%p342) target = $region32
      $region31: #{glore_unit.2} parent=11 // pred_region
        _
      $region32: #{glore_unit.2} parent=11 // pred_fallthru
        _
      // Predicated region
      $region33: #{glore_unit.2} parent=11 // pred_check
        %p345 = pneg %p184
      $region34: #{glore_unit.2} parent=11 // pred_check_branch
        %347 = sbr.rel (%p345) target = $region36
      $region35: #{glore_unit.2} parent=11 // pred_region
        _
      $region36: #{glore_unit.2} parent=11 // pred_fallthru
        _
      // Predicated region
      $region37: #{glore_unit.2} parent=11 // pred_check
        %p348 = pneg %p205
      $region38: #{glore_unit.2} parent=11 // pred_check_branch
        %350 = sbr.rel (%p348) target = $region40
      $region39: #{glore_unit.2} parent=11 // pred_region
        _
      $region40: #{glore_unit.2} parent=11 // pred_fallthru
        _
      // Predicated region
      $region41: #{glore_unit.2} parent=11 // pred_check
        %p351 = pneg %p226
      $region42: #{glore_unit.2} parent=11 // pred_check_branch
        %353 = sbr.rel (%p351) target = $region44
      $region43: #{glore_unit.2} parent=11 // pred_region
        _
      $region44: #{glore_unit.2} parent=11 // pred_fallthru
        _
      // Predicated region
      $region45: #{glore_unit.2} parent=11 // pred_check
        %p354 = pneg %p247
      $region46: #{glore_unit.2} parent=11 // pred_check_branch
        %356 = sbr.rel (%p354) target = $region48
      $region47: #{glore_unit.2} parent=11 // pred_region
        _
      $region48: #{glore_unit.2} parent=11 // pred_fallthru
        _
      // Predicated region
      $region49: #{glore_unit.2} parent=11 // pred_check
        %p357 = pneg %p268
      $region50: #{glore_unit.2} parent=11 // pred_check_branch
        %359 = sbr.rel (%p357) target = $region52
      $region51: #{glore_unit.2} parent=11 // pred_region
        _
      $region52: #{glore_unit.2} parent=11 // pred_fallthru
        _
      // Predicated region
      $region53: #{glore_unit.2} parent=11 // pred_check
        %p360 = pneg %p289
      $region54: #{glore_unit.2} parent=11 // pred_check_branch
        %362 = sbr.rel (%p360) target = $region56
      $region55: #{glore_unit.2} parent=11 // pred_region
        _
      $region56: #{glore_unit.2} parent=11 // pred_fallthru
        _
    $region12: #{glore_unit.2} parent=5 // pred_fallthru
      _
    %p363 = scmp.lt.s32.totalorder %s18, 2
    // Predicated region
    $region57: #{glore_unit.2} parent=5 // pred_check
      %p364 = pneg %p363
    $region58: #{glore_unit.2} parent=5 // pred_check_branch
      %366 = sbr.rel (%p364) target = $region60
    $region59: #{glore_unit.2} parent=5 // pred_region
      // Predicated region
      $region61: #{glore_unit.2} parent=59 // pred_check
        %p367 = pneg %p52
      $region62: #{glore_unit.2} parent=59 // pred_check_branch
        %369 = sbr.rel (%p367) target = $region64
      $region63: #{glore_unit.2} parent=59 // pred_region
        %s370 = smul.u32 2, %s26
        %p371 = scmp.lt.s32.totalorder %s25, 1
        %s372 = scalar_select %p371, %s25, 1
        %p373 = scmp.lt.s32.totalorder %s370, 1
        %s374 = scalar_select %p373, %s370, 1
        %s375 = smul.addr %s372, 2
        %s376 = sadd.s32 %s374, %s375
        %s377 = smul.addr %s376, 4
        %s378 = scalar_lea.vmem %s0, %s377
        %s379 = smul.u32 2, %s26
      $region64: #{glore_unit.2} parent=59 // pred_fallthru
        _
    $region60: #{glore_unit.2} parent=5 // pred_fallthru
      _
    %p380 = scmp.le.s32.totalorder 1, %s18
    %p381 = scmp.lt.s32.totalorder %s18, 3
    %p382 = pnand %p380, %p381
    %p383 = pneg %p382
    // Predicated region
    $region65: #{glore_unit.2} parent=5 // pred_check
      _
    $region66: #{glore_unit.2} parent=5 // pred_check_branch
      %385 = sbr.rel (%p382) target = $region68
    $region67: #{glore_unit.2} parent=5 // pred_region
      %s386 = ssub.s32 %s18, 1
      %s387 = smul.u32 2, %s28
      %p388 = scmp.lt.s32.totalorder %s27, 1
      %s389 = scalar_select %p388, %s27, 1
      %p390 = scmp.lt.s32.totalorder %s387, 1
      %s391 = scalar_select %p390, %s387, 1
      %s392 = smul.addr %s389, 2
      %s393 = sadd.s32 %s391, %s392
      %s394 = smul.addr %s393, 4
      %s395 = scalar_lea.vmem %s0, %s394
      %p396 = pneg %p58
      %p397 = pneg %p55
      %p398 = pneg %p79
      %p399 = pneg %p76
      %p400 = pneg %p100
      %p401 = pneg %p97
      %p402 = pneg %p121
      %p403 = pneg %p118
      %p404 = pneg %p142
      %p405 = pneg %p139
      %p406 = pneg %p163
      %p407 = pneg %p160
      %p408 = pneg %p184
      %p409 = pneg %p181
      %p410 = pneg %p205
      %p411 = pneg %p202
      %p412 = pneg %p226
      %p413 = pneg %p223
      %p414 = pneg %p247
      %p415 = pneg %p244
      %p416 = pneg %p268
      %p417 = pneg %p265
      %p418 = pneg %p289
      %p419 = pneg %p286
      %p420 = pneg %p315
      %p421 = pneg %p312
      %p422 = scmp.lt.s32.totalorder %s27, 1
      %s423 = scalar_select %p422, %s27, 1
      %s424 = smul.addr %s423, 2
      %s425 = scalar_lea.vmem %s12, %s424
      %s426 = smul.u32 2, %s28
      %p427 = scmp.lt.s32.totalorder %s27, 1
      %s428 = scalar_select %p427, %s27, 1
      %p429 = scmp.lt.s32.totalorder %s426, 1
      %s430 = scalar_select %p429, %s426, 1
      %s431 = smul.addr %s428, 2
      %s432 = sadd.s32 %s430, %s431
      %s433 = smul.addr %s432, 4
      %s434 = scalar_lea.vmem %s0, %s433
      %s435 = smul.u32 2, %s28
      %p436 = scmp.lt.s32.totalorder %s27, 1
      %s437 = scalar_select %p436, %s27, 1
      %s438 = smul.addr %s437, 2
      %s439 = scalar_lea.vmem %s12, %s438
      %p441 = scmp.eq.s32.totalorder %s28, 0
      // Predicated region
      $region69: #{glore_unit.2} parent=67 // pred_check
        %p442 = pneg %p441
      $region70: #{glore_unit.2} parent=67 // pred_check_branch
        %444 = sbr.rel (%p442) target = $region72
      $region71: #{glore_unit.2} parent=67 // pred_region
        %vm445 = vcmask 31744
        %446 = vst.msk [vmem:[#allocation2] sm:$0xff] %vm445, 0.0
      $region72: #{glore_unit.2} parent=67 // pred_fallthru
        _
      %v447 = vld [vmem:[%s434] sm:$0xff]
      %v449 = vcombine.high %v447, %v447
      %v451 = vpack.c.bf16 %v447, %v447
      %v452 = vpack.c.bf16 %v449, %v449
      %v453 = vld [vmem:[%s1] sm:$0xf]
      %v454 = vld [vmem:[%s2] sm:$0xff]
      %456 = vset.pattern.permute.xlu0 0
      %457 = vperm.xlu0 %456, %v454
      %v458 = vpop.permute.xlu0 %457
      %vm460 = vcmask 31744
      %v462 = vsel %vm460, %v453, 0
      %vm464 = vcmask 1041408
      %v466 = vsel %vm464, %v451, 0
      %v469 = vsel %vm464, %v452, 0
      %471 = vmatprep.subr.bf16.mxu0 0
      %472 = vmatpush1.bf16.msra.mxu0 0
      %473 = vmatprep.subr.bf16.mxu0 0
      %474 = vmatpush1.bf16.msra.mxu0 0
      %475 = vmatprep.subr.bf16.mxu0 0
      %476 = vmatpush1.bf16.msra.mxu0 0
      %477 = vmatprep.subr.bf16.mxu0 0
      %478 = vmatpush1.bf16.msra.mxu0 0
      %479 = vmatprep.subr.bf16.mxu0 0
      %480 = vmatpush1.bf16.msra.mxu0 0
      %481 = vmatprep.subr.bf16.mxu0 0
      %482 = vmatpush1.bf16.msra.mxu0 0
      %483 = vmatprep.subr.bf16.mxu0 0
      %484 = vmatpush1.bf16.msra.mxu0 0
      %485 = vmatprep.subr.bf16.mxu0 %v469
      %486 = vmatpush1.bf16.msra.mxu0 %v466
      %487 = vmatprep.subr.bf16.mxu0 0
      %488 = vmatpush2.bf16.msra.mxu0 0
      %489 = vmatprep.subr.bf16.mxu0 0
      %490 = vmatpush2.bf16.msra.mxu0 0
      %491 = vmatprep.subr.bf16.mxu0 0
      %492 = vmatpush2.bf16.msra.mxu0 0
      %493 = vmatprep.subr.bf16.mxu0 0
      %494 = vmatpush2.bf16.msra.mxu0 0
      %495 = vmatprep.subr.bf16.mxu0 0
      %496 = vmatpush2.bf16.msra.mxu0 0
      %497 = vmatprep.subr.bf16.mxu0 0
      %498 = vmatpush2.bf16.msra.mxu0 0
      %499 = vmatprep.subr.bf16.mxu0 0
      %500 = vmatpush2.bf16.msra.mxu0 0
      %501 = vmatprep.subr.bf16.mxu0 0
      %502 = vmatpush2.bf16.msra.mxu0 0
      %503 = vmatprep.mubr.bf16.mxu0 0
      %504 = vmatmul.mubr.bf16.gmra.mxu0 %v462
      %v505 = vpop.f32.mrf.mxu0
      %v506 = vadd.f32 %v458, %v505
      %v507 = vpop.f32.mrf.mxu0
      %v508 = vadd.f32 %v458, %v507
      %v509 = vpop.f32.mrf.mxu0
      %v510 = vpop.f32.mrf.mxu0
      %511 = vdwg.mxu0
      %v512 = vmax.f32 %v506, 0.0
      %v513 = vmax.f32 %v508, 0.0
      %v514 = vpack.c.bf16 %v512, %v512
      %v515 = vpack.c.bf16 %v513, %v513
      %v516 = vld [vmem:[%s3] sm:$0x3]
      %v517 = vld [vmem:[%s4] sm:$0xf]
      %519 = vset.pattern.permute.xlu0 0
      %520 = vperm.xlu0 %519, %v517
      %v521 = vpop.permute.xlu0 %520
      %v524 = vsel %vm460, %v516, 0
      %526 = vmatprep.subr.bf16.mxu0 0
      %527 = vmatpush1.bf16.msra.mxu0 0
      %528 = vmatprep.subr.bf16.mxu0 0
      %529 = vmatpush1.bf16.msra.mxu0 0
      %530 = vmatprep.subr.bf16.mxu0 0
      %531 = vmatpush1.bf16.msra.mxu0 0
      %532 = vmatprep.subr.bf16.mxu0 0
      %533 = vmatpush1.bf16.msra.mxu0 0
      %534 = vmatprep.subr.bf16.mxu0 0
      %535 = vmatpush1.bf16.msra.mxu0 0
      %536 = vmatprep.subr.bf16.mxu0 0
      %537 = vmatpush1.bf16.msra.mxu0 0
      %538 = vmatprep.subr.bf16.mxu0 0
      %539 = vmatpush1.bf16.msra.mxu0 0
      %540 = vmatprep.subr.bf16.mxu0 %v469
      %541 = vmatpush1.bf16.msra.mxu0 %v466
      %542 = vmatprep.subr.bf16.mxu0 0
      %543 = vmatpush2.bf16.msra.mxu0 0
      %544 = vmatprep.subr.bf16.mxu0 0
      %545 = vmatpush2.bf16.msra.mxu0 0
      %546 = vmatprep.subr.bf16.mxu0 0
      %547 = vmatpush2.bf16.msra.mxu0 0
      %548 = vmatprep.subr.bf16.mxu0 0
      %549 = vmatpush2.bf16.msra.mxu0 0
      %550 = vmatprep.subr.bf16.mxu0 0
      %551 = vmatpush2.bf16.msra.mxu0 0
      %552 = vmatprep.subr.bf16.mxu0 0
      %553 = vmatpush2.bf16.msra.mxu0 0
      %554 = vmatprep.subr.bf16.mxu0 0
      %555 = vmatpush2.bf16.msra.mxu0 0
      %556 = vmatprep.subr.bf16.mxu0 0
      %557 = vmatpush2.bf16.msra.mxu0 0
      %558 = vmatprep.mubr.bf16.mxu0 0
      %559 = vmatmul.mubr.bf16.gmra.mxu0 %v524
      %v560 = vpop.f32.mrf.mxu0
      %v561 = vadd.f32 %v521, %v560
      %v562 = vpop.f32.mrf.mxu0
      %v563 = vadd.f32 %v521, %v562
      %v564 = vpop.f32.mrf.mxu0
      %v565 = vpop.f32.mrf.mxu0
      %566 = vdwg.mxu0
      %v567 = vmax.f32 %v561, 0.0
      %v568 = vmax.f32 %v563, 0.0
      %v569 = vpack.c.bf16 %v567, %v567
      %v570 = vpack.c.bf16 %v568, %v568
      %v571 = vld [vmem:[#allocation2] sm:$0xff]
      %572 = vmatprep.subr.bf16.mxu0 0
      %573 = vmatpush1.bf16.xpose.msra.mxu0 0
      %574 = vmatprep.subr.bf16.mxu0 0
      %575 = vmatpush1.bf16.xpose.msra.mxu0 0
      %576 = vmatprep.subr.bf16.mxu0 0
      %577 = vmatpush1.bf16.xpose.msra.mxu0 0
      %578 = vmatprep.subr.bf16.mxu0 0
      %579 = vmatpush1.bf16.xpose.msra.mxu0 0
      %580 = vmatprep.subr.bf16.mxu0 0
      %581 = vmatpush1.bf16.xpose.msra.mxu0 0
      %582 = vmatprep.subr.bf16.mxu0 0
      %583 = vmatpush1.bf16.xpose.msra.mxu0 0
      %584 = vmatprep.subr.bf16.mxu0 0
      %585 = vmatpush1.bf16.xpose.msra.mxu0 0
      %586 = vmatprep.subr.bf16.mxu0 %v570
      %587 = vmatpush1.bf16.xpose.msra.mxu0 %v569
      %588 = vmatprep.subr.bf16.mxu0 0
      %589 = vmatpush2.bf16.xpose.msra.mxu0 0
      %590 = vmatprep.subr.bf16.mxu0 0
      %591 = vmatpush2.bf16.xpose.msra.mxu0 0
      %592 = vmatprep.subr.bf16.mxu0 0
      %593 = vmatpush2.bf16.xpose.msra.mxu0 0
      %594 = vmatprep.subr.bf16.mxu0 0
      %595 = vmatpush2.bf16.xpose.msra.mxu0 0
      %596 = vmatprep.subr.bf16.mxu0 0
      %597 = vmatpush2.bf16.xpose.msra.mxu0 0
      %598 = vmatprep.subr.bf16.mxu0 0
      %599 = vmatpush2.bf16.xpose.msra.mxu0 0
      %600 = vmatprep.subr.bf16.mxu0 0
      %601 = vmatpush2.bf16.xpose.msra.mxu0 0
      %602 = vmatprep.subr.bf16.mxu0 0
      %603 = vmatpush2.bf16.xpose.msra.mxu0 0
      %604 = vmatprep.mubr.bf16.mxu0 %v515
      %605 = vmatmul.mubr.bf16.gmra.mxu0 %v514
      %v606 = vpop.f32.mrf.mxu0
      %v607 = vadd.f32 0.0, %v606
      %v608 = vpop.f32.mrf.mxu0
      %v609 = vpop.f32.mrf.mxu0
      %v610 = vpop.f32.mrf.mxu0
      %611 = vdwg.mxu0
      %v612 = vadd.f32 %v571, %v607
      %613 = vst.msk [vmem:[#allocation2] sm:$0xff] %vm460, %v612
      // Predicated region
      $region73: #{glore_unit.2} parent=67 // pred_check
        %p614 = pneg %p441
      $region74: #{glore_unit.2} parent=67 // pred_check_branch
        %616 = sbr.rel (%p614) target = $region76
      $region75: #{glore_unit.2} parent=67 // pred_region
        %v617 = vld [vmem:[#allocation2] sm:$0xff]
        %v618 = vpack.c.bf16 %v617, %v617
        %v619 = vld [vmem:[%s5] sm:$0x3]
        %v620 = vld [vmem:[%s6] sm:$0x1]
        %v622 = vlaneseq
        %v623 = vshrl.u32 %v622, 7
        %v624 = vsub.s32 0, %v623
        %v625 = vrot.slane %v620, %v624
        %v628 = vsel %vm460, %v618, 0
        %v631 = vsel %vm460, %v619, 0
        %633 = vmatprep.subr.bf16.mxu0 0
        %634 = vmatpush1.bf16.xpose.msra.mxu0 0
        %635 = vmatprep.subr.bf16.mxu0 0
        %636 = vmatpush1.bf16.xpose.msra.mxu0 0
        %637 = vmatprep.subr.bf16.mxu0 0
        %638 = vmatpush1.bf16.xpose.msra.mxu0 0
        %639 = vmatprep.subr.bf16.mxu0 0
        %640 = vmatpush1.bf16.xpose.msra.mxu0 0
        %641 = vmatprep.subr.bf16.mxu0 0
        %642 = vmatpush1.bf16.xpose.msra.mxu0 0
        %643 = vmatprep.subr.bf16.mxu0 0
        %644 = vmatpush1.bf16.xpose.msra.mxu0 0
        %645 = vmatprep.subr.bf16.mxu0 0
        %646 = vmatpush1.bf16.xpose.msra.mxu0 0
        %647 = vmatprep.subr.bf16.mxu0 0
        %648 = vmatpush1.bf16.xpose.msra.mxu0 %v631
        %649 = vmatprep.subr.bf16.mxu0 0
        %650 = vmatpush2.bf16.xpose.msra.mxu0 0
        %651 = vmatprep.subr.bf16.mxu0 0
        %652 = vmatpush2.bf16.xpose.msra.mxu0 0
        %653 = vmatprep.subr.bf16.mxu0 0
        %654 = vmatpush2.bf16.xpose.msra.mxu0 0
        %655 = vmatprep.subr.bf16.mxu0 0
        %656 = vmatpush2.bf16.xpose.msra.mxu0 0
        %657 = vmatprep.subr.bf16.mxu0 0
        %658 = vmatpush2.bf16.xpose.msra.mxu0 0
        %659 = vmatprep.subr.bf16.mxu0 0
        %660 = vmatpush2.bf16.xpose.msra.mxu0 0
        %661 = vmatprep.subr.bf16.mxu0 0
        %662 = vmatpush2.bf16.xpose.msra.mxu0 0
        %663 = vmatprep.subr.bf16.mxu0 0
        %664 = vmatpush2.bf16.xpose.msra.mxu0 0
        %665 = vmatprep.mubr.bf16.mxu0 0
        %666 = vmatmul.mubr.bf16.gmra.mxu0 %v628
        %v667 = vpop.f32.mrf.mxu0
        %v668 = vadd.f32 %v625, %v667
        %v669 = vpop.f32.mrf.mxu0
        %v670 = vpop.f32.mrf.mxu0
        %v671 = vpop.f32.mrf.mxu0
        %672 = vdwg.mxu0
        %v673 = vadd.f32 %v668, %v617
        %v674 = vmul.f32 %v673, 0.2
        %v675 = vmax.f32 %v673, %v674
        %v676 = vld [vmem:[%s7] sm:$0xf]
        %v677 = vpack.c.bf16 %v675, %v675
        %vm678 = vcmask 64512
        %v680 = vsel %vm678, %v676, 0
        %vm682 = vcmask 1043456
        %v684 = vsel %vm682, %v677, 0
        %686 = vmatprep.subr.bf16.mxu0 0
        %687 = vmatpush1.bf16.msra.mxu0 0
        %688 = vmatprep.subr.bf16.mxu0 0
        %689 = vmatpush1.bf16.msra.mxu0 0
        %690 = vmatprep.subr.bf16.mxu0 0
        %691 = vmatpush1.bf16.msra.mxu0 0
        %692 = vmatprep.subr.bf16.mxu0 0
        %693 = vmatpush1.bf16.msra.mxu0 0
        %694 = vmatprep.subr.bf16.mxu0 0
        %695 = vmatpush1.bf16.msra.mxu0 0
        %696 = vmatprep.subr.bf16.mxu0 0
        %697 = vmatpush1.bf16.msra.mxu0 0
        %698 = vmatprep.subr.bf16.mxu0 0
        %699 = vmatpush1.bf16.msra.mxu0 0
        %700 = vmatprep.subr.bf16.mxu0 0
        %701 = vmatpush1.bf16.msra.mxu0 %v684
        %702 = vmatprep.subr.bf16.mxu0 0
        %703 = vmatpush2.bf16.msra.mxu0 0
        %704 = vmatprep.subr.bf16.mxu0 0
        %705 = vmatpush2.bf16.msra.mxu0 0
        %706 = vmatprep.subr.bf16.mxu0 0
        %707 = vmatpush2.bf16.msra.mxu0 0
        %708 = vmatprep.subr.bf16.mxu0 0
        %709 = vmatpush2.bf16.msra.mxu0 0
        %710 = vmatprep.subr.bf16.mxu0 0
        %711 = vmatpush2.bf16.msra.mxu0 0
        %712 = vmatprep.subr.bf16.mxu0 0
        %713 = vmatpush2.bf16.msra.mxu0 0
        %714 = vmatprep.subr.bf16.mxu0 0
        %715 = vmatpush2.bf16.msra.mxu0 0
        %716 = vmatprep.subr.bf16.mxu0 0
        %717 = vmatpush2.bf16.msra.mxu0 0
        %718 = vmatprep.mubr.bf16.mxu0 0
        %719 = vmatmul.mubr.bf16.gmra.mxu0 %v680
        %v720 = vpop.f32.mrf.mxu0
        %v721 = vadd.f32 0.0, %v720
        %v722 = vpop.f32.mrf.mxu0
        %v723 = vpop.f32.mrf.mxu0
        %v724 = vpop.f32.mrf.mxu0
        %725 = vdwg.mxu0
        %v726 = vpack.c.bf16 %v721, %v721
        %v727 = vld [vmem:[%s8] sm:$0x3]
        %v728 = vld [vmem:[%s9] sm:$0x1]
        %v730 = vlaneseq
        %v731 = vshrl.u32 %v730, 7
        %v732 = vsub.s32 0, %v731
        %v733 = vrot.slane %v728, %v732
        %v736 = vsel %vm460, %v726, 0
        %v739 = vsel %vm460, %v727, 0
        %741 = vmatprep.subr.bf16.mxu0 0
        %742 = vmatpush1.bf16.xpose.msra.mxu0 0
        %743 = vmatprep.subr.bf16.mxu0 0
        %744 = vmatpush1.bf16.xpose.msra.mxu0 0
        %745 = vmatprep.subr.bf16.mxu0 0
        %746 = vmatpush1.bf16.xpose.msra.mxu0 0
        %747 = vmatprep.subr.bf16.mxu0 0
        %748 = vmatpush1.bf16.xpose.msra.mxu0 0
        %749 = vmatprep.subr.bf16.mxu0 0
        %750 = vmatpush1.bf16.xpose.msra.mxu0 0
        %751 = vmatprep.subr.bf16.mxu0 0
        %752 = vmatpush1.bf16.xpose.msra.mxu0 0
        %753 = vmatprep.subr.bf16.mxu0 0
        %754 = vmatpush1.bf16.xpose.msra.mxu0 0
        %755 = vmatprep.subr.bf16.mxu0 0
        %756 = vmatpush1.bf16.xpose.msra.mxu0 %v739
        %757 = vmatprep.subr.bf16.mxu0 0
        %758 = vmatpush2.bf16.xpose.msra.mxu0 0
        %759 = vmatprep.subr.bf16.mxu0 0
        %760 = vmatpush2.bf16.xpose.msra.mxu0 0
        %761 = vmatprep.subr.bf16.mxu0 0
        %762 = vmatpush2.bf16.xpose.msra.mxu0 0
        %763 = vmatprep.subr.bf16.mxu0 0
        %764 = vmatpush2.bf16.xpose.msra.mxu0 0
        %765 = vmatprep.subr.bf16.mxu0 0
        %766 = vmatpush2.bf16.xpose.msra.mxu0 0
        %767 = vmatprep.subr.bf16.mxu0 0
        %768 = vmatpush2.bf16.xpose.msra.mxu0 0
        %769 = vmatprep.subr.bf16.mxu0 0
        %770 = vmatpush2.bf16.xpose.msra.mxu0 0
        %771 = vmatprep.subr.bf16.mxu0 0
        %772 = vmatpush2.bf16.xpose.msra.mxu0 0
        %773 = vmatprep.mubr.bf16.mxu0 0
        %774 = vmatmul.mubr.bf16.gmra.mxu0 %v736
        %v775 = vpop.f32.mrf.mxu0
        %v776 = vadd.f32 %v733, %v775
        %v777 = vpop.f32.mrf.mxu0
        %v778 = vpop.f32.mrf.mxu0
        %v779 = vpop.f32.mrf.mxu0
        %780 = vdwg.mxu0
        %v781 = vadd.f32 %v776, %v721
        %v782 = vmul.f32 %v781, 0.2
        %v783 = vmax.f32 %v781, %v782
        %v784 = vld [vmem:[%s10] sm:$0xf]
        %v785 = vpack.c.bf16 %v783, %v783
        %v787 = vsel %vm678, %v784, 0
        %v790 = vsel %vm682, %v785, 0
        %792 = vmatprep.subr.bf16.mxu0 0
        %793 = vmatpush1.bf16.msra.mxu0 0
        %794 = vmatprep.subr.bf16.mxu0 0
        %795 = vmatpush1.bf16.msra.mxu0 0
        %796 = vmatprep.subr.bf16.mxu0 0
        %797 = vmatpush1.bf16.msra.mxu0 0
        %798 = vmatprep.subr.bf16.mxu0 0
        %799 = vmatpush1.bf16.msra.mxu0 0
        %800 = vmatprep.subr.bf16.mxu0 0
        %801 = vmatpush1.bf16.msra.mxu0 0
        %802 = vmatprep.subr.bf16.mxu0 0
        %803 = vmatpush1.bf16.msra.mxu0 0
        %804 = vmatprep.subr.bf16.mxu0 0
        %805 = vmatpush1.bf16.msra.mxu0 0
        %806 = vmatprep.subr.bf16.mxu0 0
        %807 = vmatpush1.bf16.msra.mxu0 %v790
        %808 = vmatprep.subr.bf16.mxu0 0
        %809 = vmatpush2.bf16.msra.mxu0 0
        %810 = vmatprep.subr.bf16.mxu0 0
        %811 = vmatpush2.bf16.msra.mxu0 0
        %812 = vmatprep.subr.bf16.mxu0 0
        %813 = vmatpush2.bf16.msra.mxu0 0
        %814 = vmatprep.subr.bf16.mxu0 0
        %815 = vmatpush2.bf16.msra.mxu0 0
        %816 = vmatprep.subr.bf16.mxu0 0
        %817 = vmatpush2.bf16.msra.mxu0 0
        %818 = vmatprep.subr.bf16.mxu0 0
        %819 = vmatpush2.bf16.msra.mxu0 0
        %820 = vmatprep.subr.bf16.mxu0 0
        %821 = vmatpush2.bf16.msra.mxu0 0
        %822 = vmatprep.subr.bf16.mxu0 0
        %823 = vmatpush2.bf16.msra.mxu0 0
        %824 = vmatprep.mubr.bf16.mxu0 0
        %825 = vmatmul.mubr.bf16.gmra.mxu0 %v787
        %v826 = vpop.f32.mrf.mxu0
        %v827 = vadd.f32 0.0, %v826
        %v828 = vpop.f32.mrf.mxu0
        %v829 = vpop.f32.mrf.mxu0
        %v830 = vpop.f32.mrf.mxu0
        %831 = vdwg.mxu0
        %v832 = vld [vmem:[%s11] sm:$0x3]
        %v833 = vpack.c.bf16 %v827, %v827
        %v835 = vsel %vm678, %v832, 0
        %v838 = vsel %vm682, %v833, 0
        %840 = vmatprep.subr.bf16.mxu0 0
        %841 = vmatpush1.bf16.msra.mxu0 0
        %842 = vmatprep.subr.bf16.mxu0 0
        %843 = vmatpush1.bf16.msra.mxu0 0
        %844 = vmatprep.subr.bf16.mxu0 0
        %845 = vmatpush1.bf16.msra.mxu0 0
        %846 = vmatprep.subr.bf16.mxu0 0
        %847 = vmatpush1.bf16.msra.mxu0 0
        %848 = vmatprep.subr.bf16.mxu0 0
        %849 = vmatpush1.bf16.msra.mxu0 0
        %850 = vmatprep.subr.bf16.mxu0 0
        %851 = vmatpush1.bf16.msra.mxu0 0
        %852 = vmatprep.subr.bf16.mxu0 0
        %853 = vmatpush1.bf16.msra.mxu0 0
        %854 = vmatprep.subr.bf16.mxu0 0
        %855 = vmatpush1.bf16.msra.mxu0 %v838
        %856 = vmatprep.subr.bf16.mxu0 0
        %857 = vmatpush2.bf16.msra.mxu0 0
        %858 = vmatprep.subr.bf16.mxu0 0
        %859 = vmatpush2.bf16.msra.mxu0 0
        %860 = vmatprep.subr.bf16.mxu0 0
        %861 = vmatpush2.bf16.msra.mxu0 0
        %862 = vmatprep.subr.bf16.mxu0 0
        %863 = vmatpush2.bf16.msra.mxu0 0
        %864 = vmatprep.subr.bf16.mxu0 0
        %865 = vmatpush2.bf16.msra.mxu0 0
        %866 = vmatprep.subr.bf16.mxu0 0
        %867 = vmatpush2.bf16.msra.mxu0 0
        %868 = vmatprep.subr.bf16.mxu0 0
        %869 = vmatpush2.bf16.msra.mxu0 0
        %870 = vmatprep.subr.bf16.mxu0 0
        %871 = vmatpush2.bf16.msra.mxu0 0
        %872 = vmatprep.mubr.bf16.mxu0 0
        %873 = vmatmul.mubr.bf16.gmra.mxu0 %v835
        %v874 = vpop.f32.mrf.mxu0
        %v875 = vadd.f32 0.0, %v874
        %v876 = vpop.f32.mrf.mxu0
        %v877 = vpop.f32.mrf.mxu0
        %v878 = vpop.f32.mrf.mxu0
        %879 = vdwg.mxu0
        %v880 = vpack.c.bf16 %v875, %v875
        %vm881 = vcmask 25600
        %882 = vst.msk [vmem:[%s439] sm:$0x3] %vm881, %v880
      $region76: #{glore_unit.2} parent=67 // pred_fallthru
        _
      %p883 = scmp.lt.s32.totalorder %s27, 1
      %s884 = scalar_select %p883, %s27, 1
      %s885 = smul.addr %s884, 2
      %s886 = scalar_lea.vmem %s12, %s885
      // Predicated region
      $region77: #{glore_unit.2} parent=67 // pred_check
        %p887 = pneg %p312
      $region78: #{glore_unit.2} parent=67 // pred_check_branch
        %889 = sbr.rel (%p887) target = $region80
      $region79: #{glore_unit.2} parent=67 // pred_region
        _
      $region80: #{glore_unit.2} parent=67 // pred_fallthru
        _
    $region68: #{glore_unit.2} parent=5 // pred_fallthru
      _
    %p890 = scmp.le.s32.totalorder 2, %s18
    // Predicated region
    $region81: #{glore_unit.2} parent=5 // pred_check
      %p891 = pneg %p890
    $region82: #{glore_unit.2} parent=5 // pred_check_branch
      %893 = sbr.rel (%p891) target = $region84
    $region83: #{glore_unit.2} parent=5 // pred_region
      %s894 = ssub.s32 %s18, 2
      // Predicated region
      $region85: #{glore_unit.2} parent=83 // pred_check
        %p895 = pneg %p318
      $region86: #{glore_unit.2} parent=83 // pred_check_branch
        %897 = sbr.rel (%p895) target = $region88
      $region87: #{glore_unit.2} parent=83 // pred_region
        %p898 = scmp.lt.s32.totalorder %s29, 1
        %s899 = scalar_select %p898, %s29, 1
        %s900 = smul.addr %s899, 2
        %s901 = scalar_lea.vmem %s12, %s900
      $region88: #{glore_unit.2} parent=83 // pred_fallthru
        _
    $region84: #{glore_unit.2} parent=5 // pred_fallthru
      _
  $region6: #{glore_unit.2} parent=0 // loop_footer
    %s22 = sadd.s32 1, %s18
  $region7: #{glore_unit.2} parent=0 // loop_footer_branch
    %17 = sbr.rel target = $region3
  $region8: #{glore_unit.2} parent=0 // loop_exit
    _

</llo_original>
